<compile_context>
chip_gen: v7x
topology: tpu7x:2x2x1
jax: 0.10.0
libtpu: 0.0.40
codegen_flags: <defaults>
</compile_context>

<pallas_src>
import functools

import jax
import jax.numpy as jnp
from jax import lax
from jax.experimental import pallas as pl
from jax.experimental.pallas import tpu as pltpu

# ----------------------- config (synthetic, small) -----------------------
B = 2            # batch
S = 8            # seq_len
D_MODEL = 32
N_HEADS = 4
N_KV_HEADS = 2
D_HEAD = 8       # N_HEADS * D_HEAD == D_MODEL (so o_proj input dim matches)
D_MLP = 64
EPS = 1e-6
NEG_BIG = -1e30  # additive causal bias (avoids -inf edge cases)
LANE = 128       # vreg lane width / alignment unit


def _round_up(x, m):
    return ((x + m - 1) // m) * m


# ----------------------------- Pallas kernel -----------------------------
def decoder_layer_kernel(x_ref, cos_ref, sin_ref,
                         g1_ref, wqkv_ref, wo_ref,
                         g2_ref, wgu_ref, wd_ref,
                         out_ref,
                         head_out_ref,
                         *, n_heads, n_kv_heads, d_head, seg, seg_m, eps):
    f32 = jnp.float32
    bf16 = jnp.bfloat16

    x = x_ref[...]                       # (S, D) f32 -- batch dim squeezed by BlockSpec
    seq = x.shape[0]
    dh = d_head
    group = n_heads // n_kv_heads
    scale = dh ** -0.5

    def rmsnorm(v, gamma):
        ms = jnp.mean(v * v, axis=-1, keepdims=True)
        return v * lax.rsqrt(ms + eps) * gamma

    # ---- causal additive bias generated in-kernel (pure VPU, no HBM traffic) ----
    row = lax.broadcasted_iota(jnp.int32, (seq, seq), 0)
    col = lax.broadcasted_iota(jnp.int32, (seq, seq), 1)
    bias = jnp.where(col <= row, 0.0, NEG_BIG).astype(f32)      # (S, S)

    # ---- input_layernorm + single fused QKV matmul (RoPE-rotated copies folded) ----
    # packed column layout (each segment 128-lane aligned, zero padded):
    #   [ q | k | v | rotate_half(q) | rotate_half(k) ]
    h = rmsnorm(x, g1_ref[...])
    qkv = jnp.dot(h.astype(bf16), wqkv_ref[...],
                  preferred_element_type=f32)                   # (S, 5*seg) f32

    q_lin = qkv[:, 0 * seg:1 * seg]      # aligned 128-wide views
    k_lin = qkv[:, 1 * seg:2 * seg]
    v_lin = qkv[:, 2 * seg:3 * seg]
    q_rot = qkv[:, 3 * seg:4 * seg]
    k_rot = qkv[:, 4 * seg:5 * seg]

    cos = cos_ref[...]                   # (S, dh)
    sin = sin_ref[...]

    # ---- RoPE per kv head (rotate_half already folded into the weights) ----
    k_heads = []
    v_heads = []
    for kv in range(n_kv_heads):
        sl = slice(kv * dh, (kv + 1) * dh)
        k_heads.append((k_lin[:, sl] * cos + k_rot[:, sl] * sin).astype(bf16))
        v_heads.append(v_lin[:, sl].astype(bf16))

    # ---- grouped-query attention (causal) ----
    contract_last = (((1,), (1,)), ((), ()))     # q @ k^T without explicit transpose
    for hi in range(n_heads):
        kv = hi // group
        sl = slice(hi * dh, (hi + 1) * dh)
        q_h = (q_lin[:, sl] * cos + q_rot[:, sl] * sin).astype(bf16)
        s = lax.dot_general(q_h, k_heads[kv], contract_last,
                            preferred_element_type=f32) * scale + bias
        m = jnp.max(s, axis=-1, keepdims=True)
        p = jnp.exp(s - m)
        denom = jnp.sum(p, axis=-1, keepdims=True)
        r = pl.reciprocal(denom, approx=True)    # EUP vrcp
        r = r * (2.0 - denom * r)                # one Newton step -> ~f32 accuracy
        p = (p * r).astype(bf16)
        o_h = jnp.dot(p, v_heads[kv], preferred_element_type=f32)
        head_out_ref[:, sl] = o_h                # scratch write at head offset

    # one deep-K o_proj matmul over all heads (no per-head accumulation)
    attn = jnp.dot(head_out_ref[...].astype(bf16), wo_ref[...],
                   preferred_element_type=f32)
    x1 = x + attn

    # ---- post_attention_layernorm + gated SiLU MLP (gate|up fused, padded to lanes) ----
    h2 = rmsnorm(x1, g2_ref[...])
    gu = jnp.dot(h2.astype(bf16), wgu_ref[...],
                 preferred_element_type=f32)                     # (S, 2*seg_m)
    gate = gu[:, :seg_m]                                         # aligned views
    up = gu[:, seg_m:]
    act = gate * lax.logistic(gate) * up                         # silu(gate) * up (pads stay 0)
    mlp = jnp.dot(act.astype(bf16), wd_ref[...],
                  preferred_element_type=f32)

    out_ref[...] = x1 + mlp


# ------------------------------ wrapper ----------------------------------
def _rotate_half_cols(w, n_heads, d_head):
    """Permute/sign the output columns of a projection weight per head block so
    that  h @ w_rot == rotate_half(h @ w)  (applied per head)."""
    d_in = w.shape[0]
    half = d_head // 2
    w3 = w.reshape(d_in, n_heads, d_head)
    w3r = jnp.concatenate([-w3[..., half:], w3[..., :half]], axis=-1)
    return w3r.reshape(d_in, n_heads * d_head)


def _pad_cols(w, width):
    return jnp.pad(w, ((0, 0), (0, width - w.shape[1])))


def decoder_layer(x, cos, sin, params):
    g1, wq, wk, wv, wo, g2, wg, wu, wd = params
    b, s, d = x.shape
    dh = cos.shape[-1]
    n_heads = wq.shape[-1] // dh
    n_kv = wk.shape[-1] // dh
    d_mlp = wg.shape[-1]
    qw = n_heads * dh
    kw = n_kv * dh

    # --- host-side, one-time weight packing (128-lane aligned segments, bf16) ---
    seg = _round_up(max(qw, kw), LANE)           # segment width for q/k/v/q_rot/k_rot
    seg_m = _round_up(d_mlp, LANE)               # segment width for gate/up
    wqkv = jnp.concatenate(
        [_pad_cols(wq, seg), _pad_cols(wk, seg), _pad_cols(wv, seg),
         _pad_cols(_rotate_half_cols(wq, n_heads, dh), seg),
         _pad_cols(_rotate_half_cols(wk, n_kv, dh), seg)],
        axis=1).astype(jnp.bfloat16)             # (D, 5*seg)
    wo_bf = wo.astype(jnp.bfloat16)              # (qw, D)
    wgu = jnp.concatenate(
        [_pad_cols(wg, seg_m), _pad_cols(wu, seg_m)], axis=1).astype(jnp.bfloat16)
    wd_bf = jnp.pad(wd, ((0, seg_m - d_mlp), (0, 0))).astype(jnp.bfloat16)  # (seg_m, D)

    kernel = functools.partial(
        decoder_layer_kernel,
        n_heads=n_heads, n_kv_heads=n_kv, d_head=dh,
        seg=seg, seg_m=seg_m, eps=EPS)

    def full(arr):
        n = arr.ndim
        return pl.BlockSpec(arr.shape, lambda bi, _n=n: (0,) * _n)

    # NOTE(scale-up): at real model dims the weight specs must become K/N-tiled
    # (+ single-buffered since they are grid-invariant) and sized for v7x's
    # 64 MiB VMEM; full-array blocks are only OK because the weights are tiny.
    grid_spec = pltpu.PrefetchScalarGridSpec(
        num_scalar_prefetch=0,
        grid=(b,),
        in_specs=[
            pl.BlockSpec((None, s, d), lambda bi: (bi, 0, 0)),   # x (batch squeezed)
            full(cos), full(sin),                                # RoPE tables (S, dh)
            full(g1),                                            # input_layernorm
            full(wqkv), full(wo_bf),                             # attention weights
            full(g2),                                            # post_attn_layernorm
            full(wgu), full(wd_bf),                              # MLP weights
        ],
        out_specs=pl.BlockSpec((None, s, d), lambda bi: (bi, 0, 0)),
        scratch_shapes=[pltpu.VMEM((s, qw), jnp.float32)],       # per-head attn outputs
    )

    return pl.pallas_call(
        kernel,
        out_shape=jax.ShapeDtypeStruct((b, s, d), jnp.float32),
        grid_spec=grid_spec,
        compiler_params=pltpu.CompilerParams(dimension_semantics=("parallel",)),
    )(x, cos, sin, g1, wqkv, wo_bf, g2, wgu, wd_bf)


# --------------------------- pure-JAX reference ---------------------------
def reference(x, cos, sin, params):
    g1, wq, wk, wv, wo, g2, wg, wu, wd = params

    def rmsnorm(v, gamma):
        ms = jnp.mean(v * v, axis=-1, keepdims=True)
        return v * lax.rsqrt(ms + EPS) * gamma

    def rotate_half(t):
        half = t.shape[-1] // 2
        return jnp.concatenate([-t[..., half:], t[..., :half]], axis=-1)

    b, s, d = x.shape
    h = rmsnorm(x, g1)
    q = (h @ wq).reshape(b, s, N_HEADS, D_HEAD).transpose(0, 2, 1, 3)
    k = (h @ wk).reshape(b, s, N_KV_HEADS, D_HEAD).transpose(0, 2, 1, 3)
    v = (h @ wv).reshape(b, s, N_KV_HEADS, D_HEAD).transpose(0, 2, 1, 3)
    q = q * cos + rotate_half(q) * sin
    k = k * cos + rotate_half(k) * sin
    group = N_HEADS // N_KV_HEADS
    k = jnp.repeat(k, group, axis=1)
    v = jnp.repeat(v, group, axis=1)
    scores = jnp.einsum('bhqd,bhkd->bhqk', q, k) * (D_HEAD ** -0.5)
    mask = jnp.tril(jnp.ones((s, s), dtype=bool))
    scores = jnp.where(mask, scores, -jnp.inf)
    p = jax.nn.softmax(scores, axis=-1)
    out = jnp.einsum('bhqk,bhkd->bhqd', p, v)
    out = out.transpose(0, 2, 1, 3).reshape(b, s, d) @ wo
    x1 = x + out
    h2 = rmsnorm(x1, g2)
    mlp = (jax.nn.silu(h2 @ wg) * (h2 @ wu)) @ wd
    return x1 + mlp


# -------------------------------- main ------------------------------------
if __name__ == "__main__":
    key = jax.random.PRNGKey(0)
    keys = jax.random.split(key, 12)

    x = jax.random.normal(keys[0], (B, S, D_MODEL), dtype=jnp.float32)

    # RoPE tables (seq, d_head)
    inv_freq = 1.0 / (10000.0 ** (jnp.arange(0, D_HEAD, 2, dtype=jnp.float32) / D_HEAD))
    pos = jnp.arange(S, dtype=jnp.float32)
    ang = pos[:, None] * inv_freq[None, :]                  # (S, d_head/2)
    cos = jnp.concatenate([jnp.cos(ang), jnp.cos(ang)], axis=-1)
    sin = jnp.concatenate([jnp.sin(ang), jnp.sin(ang)], axis=-1)

    def w(k, shape, scale=0.05):
        return scale * jax.random.normal(k, shape, dtype=jnp.float32)

    params = (
        1.0 + 0.1 * jax.random.normal(keys[1], (1, D_MODEL), dtype=jnp.float32),  # g1
        w(keys[2], (D_MODEL, N_HEADS * D_HEAD)),                                  # wq
        w(keys[3], (D_MODEL, N_KV_HEADS * D_HEAD)),                               # wk
        w(keys[4], (D_MODEL, N_KV_HEADS * D_HEAD)),                               # wv
        w(keys[5], (D_MODEL, D_MODEL)),                                           # wo
        1.0 + 0.1 * jax.random.normal(keys[6], (1, D_MODEL), dtype=jnp.float32),  # g2
        w(keys[7], (D_MODEL, D_MLP)),                                             # w_gate
        w(keys[8], (D_MODEL, D_MLP)),                                             # w_up
        w(keys[9], (D_MLP, D_MODEL)),                                             # w_down
    )

    out = decoder_layer(x, cos, sin, params)
    out = jax.block_until_ready(out)

    ref = reference(x, cos, sin, params)
    assert out.shape == (B, S, D_MODEL)
    # bf16 MXU operands (f32 accumulation) -> looser tolerance than the pure-f32 path.
    assert jnp.allclose(out, ref, rtol=2e-2, atol=2e-2), \
        f"max abs err {jnp.max(jnp.abs(out - ref))}"

    print("KERNEL_OK")
</pallas_src>

<mosaic_0001>
module attributes {stable_mosaic.version = 11 : i64} {
  func.func @decoder_layer_kernel(%arg0: i32, %arg1: memref<1x8x32xf32, #tpu.memory_space<vmem>>, %arg2: memref<8x8xf32, #tpu.memory_space<vmem>>, %arg3: memref<8x8xf32, #tpu.memory_space<vmem>>, %arg4: memref<1x32xf32, #tpu.memory_space<vmem>>, %arg5: memref<32x640xbf16, #tpu.memory_space<vmem>>, %arg6: memref<32x32xbf16, #tpu.memory_space<vmem>>, %arg7: memref<1x32xf32, #tpu.memory_space<vmem>>, %arg8: memref<32x256xbf16, #tpu.memory_space<vmem>>, %arg9: memref<128x32xbf16, #tpu.memory_space<vmem>>, %arg10: memref<1x8x32xf32, #tpu.memory_space<vmem>>, %arg11: memref<8x32xf32, #tpu.memory_space<vmem>>) attributes {dimension_semantics = [#tpu.dimension_semantics<parallel>], iteration_bounds = array<i64: 2>, scalar_prefetch = 0 : i64, scratch_operands = 1 : i64, tpu.core_type = #tpu.core_type<tc>, window_params = [{transform_indices = @transform_0, window_bounds = array<i64: 1, 8, 32>}, {pipeline_mode = #tpu.pipeline_mode<synchronous>, transform_indices = @transform_1, window_bounds = array<i64: 8, 8>}, {pipeline_mode = #tpu.pipeline_mode<synchronous>, transform_indices = @transform_2, window_bounds = array<i64: 8, 8>}, {pipeline_mode = #tpu.pipeline_mode<synchronous>, transform_indices = @transform_3, window_bounds = array<i64: 1, 32>}, {pipeline_mode = #tpu.pipeline_mode<synchronous>, transform_indices = @transform_4, window_bounds = array<i64: 32, 640>}, {pipeline_mode = #tpu.pipeline_mode<synchronous>, transform_indices = @transform_5, window_bounds = array<i64: 32, 32>}, {pipeline_mode = #tpu.pipeline_mode<synchronous>, transform_indices = @transform_6, window_bounds = array<i64: 1, 32>}, {pipeline_mode = #tpu.pipeline_mode<synchronous>, transform_indices = @transform_7, window_bounds = array<i64: 32, 256>}, {pipeline_mode = #tpu.pipeline_mode<synchronous>, transform_indices = @transform_8, window_bounds = array<i64: 128, 32>}, {transform_indices = @transform_9, window_bounds = array<i64: 1, 8, 32>}]} {
    %c0 = arith.constant 0 : index
    %c0_0 = arith.constant 0 : index
    %c0_1 = arith.constant 0 : index
    %0 = vector.load %arg1[%c0, %c0_0, %c0_1] : memref<1x8x32xf32, #tpu.memory_space<vmem>>, vector<1x8x32xf32>
    %1 = vector.shape_cast %0 : vector<1x8x32xf32> to vector<8x32xf32>
    %2 = tpu.iota {dimensions = array<i32: 0>} : vector<8x8xi32>
    %3 = tpu.iota {dimensions = array<i32: 1>} : vector<8x8xi32>
    %4 = arith.cmpi sle, %3, %2 : vector<8x8xi32>
    %cst = arith.constant 0.000000e+00 : f32
    %cst_2 = arith.constant -1.000000e+30 : f32
    %5 = vector.broadcast %cst : f32 to vector<8x8xf32>
    %6 = vector.broadcast %cst_2 : f32 to vector<8x8xf32>
    %7 = arith.select %4, %5, %6 : vector<8x8xi1>, vector<8x8xf32>
    %c0_3 = arith.constant 0 : index
    %c0_4 = arith.constant 0 : index
    %8 = vector.load %arg4[%c0_3, %c0_4] : memref<1x32xf32, #tpu.memory_space<vmem>>, vector<1x32xf32>
    %9 = arith.mulf %1, %1 : vector<8x32xf32>
    %cst_5 = arith.constant dense<0.000000e+00> : vector<8xf32>
    %10 = vector.multi_reduction <add>, %9, %cst_5 [1] : vector<8x32xf32> to vector<8xf32>
    %11 = vector.shape_cast %10 : vector<8xf32> to vector<8x1xf32>
    %cst_6 = arith.constant 3.200000e+01 : f32
    %12 = vector.broadcast %cst_6 : f32 to vector<8x1xf32>
    %13 = arith.divf %11, %12 : vector<8x1xf32>
    %cst_7 = arith.constant 9.99999997E-7 : f32
    %14 = vector.broadcast %cst_7 : f32 to vector<8x1xf32>
    %15 = arith.addf %13, %14 : vector<8x1xf32>
    %16 = math.rsqrt %15 : vector<8x1xf32>
    %17 = vector.broadcast %16 : vector<8x1xf32> to vector<8x32xf32>
    %18 = arith.mulf %1, %17 : vector<8x32xf32>
    %19 = vector.broadcast %8 : vector<1x32xf32> to vector<8x32xf32>
    %20 = arith.mulf %18, %19 : vector<8x32xf32>
    %21 = arith.truncf %20 : vector<8x32xf32> to vector<8x32xbf16>
    %c0_8 = arith.constant 0 : index
    %c0_9 = arith.constant 0 : index
    %22 = vector.load %arg5[%c0_8, %c0_9] : memref<32x640xbf16, #tpu.memory_space<vmem>>, vector<32x640xbf16>
    %cst_10 = arith.constant dense<0.000000e+00> : vector<8x640xf32>
    %23 = tpu.matmul %21, %22, %cst_10 {dimension_numbers = #tpu.dot_dimension_numbers<[1], [0], [0], [1], [0, 0, 1, 1], [], []>} : vector<8x32xbf16>, vector<32x640xbf16>, vector<8x640xf32> -> vector<8x640xf32>
    %24 = vector.extract_strided_slice %23 {offsets = [0, 0], sizes = [8, 128], strides = [1, 1]} : vector<8x640xf32> to vector<8x128xf32>
    %25 = vector.extract_strided_slice %23 {offsets = [0, 128], sizes = [8, 128], strides = [1, 1]} : vector<8x640xf32> to vector<8x128xf32>
    %26 = vector.extract_strided_slice %23 {offsets = [0, 256], sizes = [8, 128], strides = [1, 1]} : vector<8x640xf32> to vector<8x128xf32>
    %27 = vector.extract_strided_slice %23 {offsets = [0, 384], sizes = [8, 128], strides = [1, 1]} : vector<8x640xf32> to vector<8x128xf32>
    %28 = vector.extract_strided_slice %23 {offsets = [0, 512], sizes = [8, 128], strides = [1, 1]} : vector<8x640xf32> to vector<8x128xf32>
    %c0_11 = arith.constant 0 : index
    %c0_12 = arith.constant 0 : index
    %29 = vector.load %arg2[%c0_11, %c0_12] : memref<8x8xf32, #tpu.memory_space<vmem>>, vector<8x8xf32>
    %c0_13 = arith.constant 0 : index
    %c0_14 = arith.constant 0 : index
    %30 = vector.load %arg3[%c0_13, %c0_14] : memref<8x8xf32, #tpu.memory_space<vmem>>, vector<8x8xf32>
    %31 = vector.extract_strided_slice %25 {offsets = [0, 0], sizes = [8, 8], strides = [1, 1]} : vector<8x128xf32> to vector<8x8xf32>
    %32 = arith.mulf %31, %29 : vector<8x8xf32>
    %33 = vector.extract_strided_slice %28 {offsets = [0, 0], sizes = [8, 8], strides = [1, 1]} : vector<8x128xf32> to vector<8x8xf32>
    %34 = arith.mulf %33, %30 : vector<8x8xf32>
    %35 = arith.addf %32, %34 : vector<8x8xf32>
    %36 = arith.truncf %35 : vector<8x8xf32> to vector<8x8xbf16>
    %37 = vector.extract_strided_slice %26 {offsets = [0, 0], sizes = [8, 8], strides = [1, 1]} : vector<8x128xf32> to vector<8x8xf32>
    %38 = arith.truncf %37 : vector<8x8xf32> to vector<8x8xbf16>
    %39 = vector.extract_strided_slice %25 {offsets = [0, 8], sizes = [8, 8], strides = [1, 1]} : vector<8x128xf32> to vector<8x8xf32>
    %40 = arith.mulf %39, %29 : vector<8x8xf32>
    %41 = vector.extract_strided_slice %28 {offsets = [0, 8], sizes = [8, 8], strides = [1, 1]} : vector<8x128xf32> to vector<8x8xf32>
    %42 = arith.mulf %41, %30 : vector<8x8xf32>
    %43 = arith.addf %40, %42 : vector<8x8xf32>
    %44 = arith.truncf %43 : vector<8x8xf32> to vector<8x8xbf16>
    %45 = vector.extract_strided_slice %26 {offsets = [0, 8], sizes = [8, 8], strides = [1, 1]} : vector<8x128xf32> to vector<8x8xf32>
    %46 = arith.truncf %45 : vector<8x8xf32> to vector<8x8xbf16>
    %47 = vector.extract_strided_slice %24 {offsets = [0, 0], sizes = [8, 8], strides = [1, 1]} : vector<8x128xf32> to vector<8x8xf32>
    %48 = arith.mulf %47, %29 : vector<8x8xf32>
    %49 = vector.extract_strided_slice %27 {offsets = [0, 0], sizes = [8, 8], strides = [1, 1]} : vector<8x128xf32> to vector<8x8xf32>
    %50 = arith.mulf %49, %30 : vector<8x8xf32>
    %51 = arith.addf %48, %50 : vector<8x8xf32>
    %52 = arith.truncf %51 : vector<8x8xf32> to vector<8x8xbf16>
    %cst_15 = arith.constant dense<0.000000e+00> : vector<8x8xf32>
    %53 = tpu.matmul %52, %36, %cst_15 {dimension_numbers = #tpu.dot_dimension_numbers<[1], [1], [0], [0], [0, 0, 1, 0], [], []>} : vector<8x8xbf16>, vector<8x8xbf16>, vector<8x8xf32> -> vector<8x8xf32>
    %cst_16 = arith.constant 0.353553385 : f32
    %54 = vector.broadcast %cst_16 : f32 to vector<8x8xf32>
    %55 = arith.mulf %53, %54 : vector<8x8xf32>
    %56 = arith.addf %55, %7 : vector<8x8xf32>
    %cst_17 = arith.constant dense<0xFF800000> : vector<8xf32>
    %57 = vector.multi_reduction <maximumf>, %56, %cst_17 [1] : vector<8x8xf32> to vector<8xf32>
    %58 = vector.shape_cast %57 : vector<8xf32> to vector<8x1xf32>
    %59 = vector.broadcast %58 : vector<8x1xf32> to vector<8x8xf32>
    %60 = arith.subf %56, %59 : vector<8x8xf32>
    %61 = math.exp %60 : vector<8x8xf32>
    %cst_18 = arith.constant dense<0.000000e+00> : vector<8xf32>
    %62 = vector.multi_reduction <add>, %61, %cst_18 [1] : vector<8x8xf32> to vector<8xf32>
    %63 = vector.shape_cast %62 : vector<8xf32> to vector<8x1xf32>
    %64 = tpu.reciprocal %63 {approx = true} : vector<8x1xf32> -> vector<8x1xf32>
    %65 = arith.mulf %63, %64 : vector<8x1xf32>
    %cst_19 = arith.constant 2.000000e+00 : f32
    %66 = vector.broadcast %cst_19 : f32 to vector<8x1xf32>
    %67 = arith.subf %66, %65 : vector<8x1xf32>
    %68 = arith.mulf %64, %67 : vector<8x1xf32>
    %69 = vector.broadcast %68 : vector<8x1xf32> to vector<8x8xf32>
    %70 = arith.mulf %61, %69 : vector<8x8xf32>
    %71 = arith.truncf %70 : vector<8x8xf32> to vector<8x8xbf16>
    %cst_20 = arith.constant dense<0.000000e+00> : vector<8x8xf32>
    %72 = tpu.matmul %71, %38, %cst_20 {dimension_numbers = #tpu.dot_dimension_numbers<[1], [0], [0], [1], [0, 0, 1, 1], [], []>} : vector<8x8xbf16>, vector<8x8xbf16>, vector<8x8xf32> -> vector<8x8xf32>
    %c0_21 = arith.constant 0 : index
    %c0_22 = arith.constant 0 : index
    %73 = vector.load %arg11[%c0_21, %c0_22] : memref<8x32xf32, #tpu.memory_space<vmem>>, vector<8x8xf32>
    tpu.vector_store %arg11[%c0_21, %c0_22], %72 {strides = array<i32>} : memref<8x32xf32, #tpu.memory_space<vmem>>, vector<8x8xf32>,
    %74 = vector.extract_strided_slice %24 {offsets = [0, 8], sizes = [8, 8], strides = [1, 1]} : vector<8x128xf32> to vector<8x8xf32>
    %75 = arith.mulf %74, %29 : vector<8x8xf32>
    %76 = vector.extract_strided_slice %27 {offsets = [0, 8], sizes = [8, 8], strides = [1, 1]} : vector<8x128xf32> to vector<8x8xf32>
    %77 = arith.mulf %76, %30 : vector<8x8xf32>
    %78 = arith.addf %75, %77 : vector<8x8xf32>
    %79 = arith.truncf %78 : vector<8x8xf32> to vector<8x8xbf16>
    %cst_23 = arith.constant dense<0.000000e+00> : vector<8x8xf32>
    %80 = tpu.matmul %79, %36, %cst_23 {dimension_numbers = #tpu.dot_dimension_numbers<[1], [1], [0], [0], [0, 0, 1, 0], [], []>} : vector<8x8xbf16>, vector<8x8xbf16>, vector<8x8xf32> -> vector<8x8xf32>
    %cst_24 = arith.constant 0.353553385 : f32
    %81 = vector.broadcast %cst_24 : f32 to vector<8x8xf32>
    %82 = arith.mulf %80, %81 : vector<8x8xf32>
    %83 = arith.addf %82, %7 : vector<8x8xf32>
    %cst_25 = arith.constant dense<0xFF800000> : vector<8xf32>
    %84 = vector.multi_reduction <maximumf>, %83, %cst_25 [1] : vector<8x8xf32> to vector<8xf32>
    %85 = vector.shape_cast %84 : vector<8xf32> to vector<8x1xf32>
    %86 = vector.broadcast %85 : vector<8x1xf32> to vector<8x8xf32>
    %87 = arith.subf %83, %86 : vector<8x8xf32>
    %88 = math.exp %87 : vector<8x8xf32>
    %cst_26 = arith.constant dense<0.000000e+00> : vector<8xf32>
    %89 = vector.multi_reduction <add>, %88, %cst_26 [1] : vector<8x8xf32> to vector<8xf32>
    %90 = vector.shape_cast %89 : vector<8xf32> to vector<8x1xf32>
    %91 = tpu.reciprocal %90 {approx = true} : vector<8x1xf32> -> vector<8x1xf32>
    %92 = arith.mulf %90, %91 : vector<8x1xf32>
    %cst_27 = arith.constant 2.000000e+00 : f32
    %93 = vector.broadcast %cst_27 : f32 to vector<8x1xf32>
    %94 = arith.subf %93, %92 : vector<8x1xf32>
    %95 = arith.mulf %91, %94 : vector<8x1xf32>
    %96 = vector.broadcast %95 : vector<8x1xf32> to vector<8x8xf32>
    %97 = arith.mulf %88, %96 : vector<8x8xf32>
    %98 = arith.truncf %97 : vector<8x8xf32> to vector<8x8xbf16>
    %cst_28 = arith.constant dense<0.000000e+00> : vector<8x8xf32>
    %99 = tpu.matmul %98, %38, %cst_28 {dimension_numbers = #tpu.dot_dimension_numbers<[1], [0], [0], [1], [0, 0, 1, 1], [], []>} : vector<8x8xbf16>, vector<8x8xbf16>, vector<8x8xf32> -> vector<8x8xf32>
    %c0_29 = arith.constant 0 : index
    %c8 = arith.constant 8 : index
    %100 = vector.load %arg11[%c0_29, %c8] : memref<8x32xf32, #tpu.memory_space<vmem>>, vector<8x8xf32>
    tpu.vector_store %arg11[%c0_29, %c8], %99 {strides = array<i32>} : memref<8x32xf32, #tpu.memory_space<vmem>>, vector<8x8xf32>,
    %101 = vector.extract_strided_slice %24 {offsets = [0, 16], sizes = [8, 8], strides = [1, 1]} : vector<8x128xf32> to vector<8x8xf32>
    %102 = arith.mulf %101, %29 : vector<8x8xf32>
    %103 = vector.extract_strided_slice %27 {offsets = [0, 16], sizes = [8, 8], strides = [1, 1]} : vector<8x128xf32> to vector<8x8xf32>
    %104 = arith.mulf %103, %30 : vector<8x8xf32>
    %105 = arith.addf %102, %104 : vector<8x8xf32>
    %106 = arith.truncf %105 : vector<8x8xf32> to vector<8x8xbf16>
    %cst_30 = arith.constant dense<0.000000e+00> : vector<8x8xf32>
    %107 = tpu.matmul %106, %44, %cst_30 {dimension_numbers = #tpu.dot_dimension_numbers<[1], [1], [0], [0], [0, 0, 1, 0], [], []>} : vector<8x8xbf16>, vector<8x8xbf16>, vector<8x8xf32> -> vector<8x8xf32>
    %cst_31 = arith.constant 0.353553385 : f32
    %108 = vector.broadcast %cst_31 : f32 to vector<8x8xf32>
    %109 = arith.mulf %107, %108 : vector<8x8xf32>
    %110 = arith.addf %109, %7 : vector<8x8xf32>
    %cst_32 = arith.constant dense<0xFF800000> : vector<8xf32>
    %111 = vector.multi_reduction <maximumf>, %110, %cst_32 [1] : vector<8x8xf32> to vector<8xf32>
    %112 = vector.shape_cast %111 : vector<8xf32> to vector<8x1xf32>
    %113 = vector.broadcast %112 : vector<8x1xf32> to vector<8x8xf32>
    %114 = arith.subf %110, %113 : vector<8x8xf32>
    %115 = math.exp %114 : vector<8x8xf32>
    %cst_33 = arith.constant dense<0.000000e+00> : vector<8xf32>
    %116 = vector.multi_reduction <add>, %115, %cst_33 [1] : vector<8x8xf32> to vector<8xf32>
    %117 = vector.shape_cast %116 : vector<8xf32> to vector<8x1xf32>
    %118 = tpu.reciprocal %117 {approx = true} : vector<8x1xf32> -> vector<8x1xf32>
    %119 = arith.mulf %117, %118 : vector<8x1xf32>
    %cst_34 = arith.constant 2.000000e+00 : f32
    %120 = vector.broadcast %cst_34 : f32 to vector<8x1xf32>
    %121 = arith.subf %120, %119 : vector<8x1xf32>
    %122 = arith.mulf %118, %121 : vector<8x1xf32>
    %123 = vector.broadcast %122 : vector<8x1xf32> to vector<8x8xf32>
    %124 = arith.mulf %115, %123 : vector<8x8xf32>
    %125 = arith.truncf %124 : vector<8x8xf32> to vector<8x8xbf16>
    %cst_35 = arith.constant dense<0.000000e+00> : vector<8x8xf32>
    %126 = tpu.matmul %125, %46, %cst_35 {dimension_numbers = #tpu.dot_dimension_numbers<[1], [0], [0], [1], [0, 0, 1, 1], [], []>} : vector<8x8xbf16>, vector<8x8xbf16>, vector<8x8xf32> -> vector<8x8xf32>
    %c0_36 = arith.constant 0 : index
    %c16 = arith.constant 16 : index
    %127 = vector.load %arg11[%c0_36, %c16] : memref<8x32xf32, #tpu.memory_space<vmem>>, vector<8x8xf32>
    tpu.vector_store %arg11[%c0_36, %c16], %126 {strides = array<i32>} : memref<8x32xf32, #tpu.memory_space<vmem>>, vector<8x8xf32>,
    %128 = vector.extract_strided_slice %24 {offsets = [0, 24], sizes = [8, 8], strides = [1, 1]} : vector<8x128xf32> to vector<8x8xf32>
    %129 = arith.mulf %128, %29 : vector<8x8xf32>
    %130 = vector.extract_strided_slice %27 {offsets = [0, 24], sizes = [8, 8], strides = [1, 1]} : vector<8x128xf32> to vector<8x8xf32>
    %131 = arith.mulf %130, %30 : vector<8x8xf32>
    %132 = arith.addf %129, %131 : vector<8x8xf32>
    %133 = arith.truncf %132 : vector<8x8xf32> to vector<8x8xbf16>
    %cst_37 = arith.constant dense<0.000000e+00> : vector<8x8xf32>
    %134 = tpu.matmul %133, %44, %cst_37 {dimension_numbers = #tpu.dot_dimension_numbers<[1], [1], [0], [0], [0, 0, 1, 0], [], []>} : vector<8x8xbf16>, vector<8x8xbf16>, vector<8x8xf32> -> vector<8x8xf32>
    %cst_38 = arith.constant 0.353553385 : f32
    %135 = vector.broadcast %cst_38 : f32 to vector<8x8xf32>
    %136 = arith.mulf %134, %135 : vector<8x8xf32>
    %137 = arith.addf %136, %7 : vector<8x8xf32>
    %cst_39 = arith.constant dense<0xFF800000> : vector<8xf32>
    %138 = vector.multi_reduction <maximumf>, %137, %cst_39 [1] : vector<8x8xf32> to vector<8xf32>
    %139 = vector.shape_cast %138 : vector<8xf32> to vector<8x1xf32>
    %140 = vector.broadcast %139 : vector<8x1xf32> to vector<8x8xf32>
    %141 = arith.subf %137, %140 : vector<8x8xf32>
    %142 = math.exp %141 : vector<8x8xf32>
    %cst_40 = arith.constant dense<0.000000e+00> : vector<8xf32>
    %143 = vector.multi_reduction <add>, %142, %cst_40 [1] : vector<8x8xf32> to vector<8xf32>
    %144 = vector.shape_cast %143 : vector<8xf32> to vector<8x1xf32>
    %145 = tpu.reciprocal %144 {approx = true} : vector<8x1xf32> -> vector<8x1xf32>
    %146 = arith.mulf %144, %145 : vector<8x1xf32>
    %cst_41 = arith.constant 2.000000e+00 : f32
    %147 = vector.broadcast %cst_41 : f32 to vector<8x1xf32>
    %148 = arith.subf %147, %146 : vector<8x1xf32>
    %149 = arith.mulf %145, %148 : vector<8x1xf32>
    %150 = vector.broadcast %149 : vector<8x1xf32> to vector<8x8xf32>
    %151 = arith.mulf %142, %150 : vector<8x8xf32>
    %152 = arith.truncf %151 : vector<8x8xf32> to vector<8x8xbf16>
    %cst_42 = arith.constant dense<0.000000e+00> : vector<8x8xf32>
    %153 = tpu.matmul %152, %46, %cst_42 {dimension_numbers = #tpu.dot_dimension_numbers<[1], [0], [0], [1], [0, 0, 1, 1], [], []>} : vector<8x8xbf16>, vector<8x8xbf16>, vector<8x8xf32> -> vector<8x8xf32>
    %c0_43 = arith.constant 0 : index
    %c24 = arith.constant 24 : index
    %154 = vector.load %arg11[%c0_43, %c24] : memref<8x32xf32, #tpu.memory_space<vmem>>, vector<8x8xf32>
    tpu.vector_store %arg11[%c0_43, %c24], %153 {strides = array<i32>} : memref<8x32xf32, #tpu.memory_space<vmem>>, vector<8x8xf32>,
    %c0_44 = arith.constant 0 : index
    %c0_45 = arith.constant 0 : index
    %155 = vector.load %arg11[%c0_44, %c0_45] : memref<8x32xf32, #tpu.memory_space<vmem>>, vector<8x32xf32>
    %156 = arith.truncf %155 : vector<8x32xf32> to vector<8x32xbf16>
    %c0_46 = arith.constant 0 : index
    %c0_47 = arith.constant 0 : index
    %157 = vector.load %arg6[%c0_46, %c0_47] : memref<32x32xbf16, #tpu.memory_space<vmem>>, vector<32x32xbf16>
    %cst_48 = arith.constant dense<0.000000e+00> : vector<8x32xf32>
    %158 = tpu.matmul %156, %157, %cst_48 {dimension_numbers = #tpu.dot_dimension_numbers<[1], [0], [0], [1], [0, 0, 1, 1], [], []>} : vector<8x32xbf16>, vector<32x32xbf16>, vector<8x32xf32> -> vector<8x32xf32>
    %159 = arith.addf %1, %158 : vector<8x32xf32>
    %c0_49 = arith.constant 0 : index
    %c0_50 = arith.constant 0 : index
    %160 = vector.load %arg7[%c0_49, %c0_50] : memref<1x32xf32, #tpu.memory_space<vmem>>, vector<1x32xf32>
    %161 = arith.mulf %159, %159 : vector<8x32xf32>
    %cst_51 = arith.constant dense<0.000000e+00> : vector<8xf32>
    %162 = vector.multi_reduction <add>, %161, %cst_51 [1] : vector<8x32xf32> to vector<8xf32>
    %163 = vector.shape_cast %162 : vector<8xf32> to vector<8x1xf32>
    %cst_52 = arith.constant 3.200000e+01 : f32
    %164 = vector.broadcast %cst_52 : f32 to vector<8x1xf32>
    %165 = arith.divf %163, %164 : vector<8x1xf32>
    %cst_53 = arith.constant 9.99999997E-7 : f32
    %166 = vector.broadcast %cst_53 : f32 to vector<8x1xf32>
    %167 = arith.addf %165, %166 : vector<8x1xf32>
    %168 = math.rsqrt %167 : vector<8x1xf32>
    %169 = vector.broadcast %168 : vector<8x1xf32> to vector<8x32xf32>
    %170 = arith.mulf %159, %169 : vector<8x32xf32>
    %171 = vector.broadcast %160 : vector<1x32xf32> to vector<8x32xf32>
    %172 = arith.mulf %170, %171 : vector<8x32xf32>
    %173 = arith.truncf %172 : vector<8x32xf32> to vector<8x32xbf16>
    %c0_54 = arith.constant 0 : index
    %c0_55 = arith.constant 0 : index
    %174 = vector.load %arg8[%c0_54, %c0_55] : memref<32x256xbf16, #tpu.memory_space<vmem>>, vector<32x256xbf16>
    %cst_56 = arith.constant dense<0.000000e+00> : vector<8x256xf32>
    %175 = tpu.matmul %173, %174, %cst_56 {dimension_numbers = #tpu.dot_dimension_numbers<[1], [0], [0], [1], [0, 0, 1, 1], [], []>} : vector<8x32xbf16>, vector<32x256xbf16>, vector<8x256xf32> -> vector<8x256xf32>
    %176 = vector.extract_strided_slice %175 {offsets = [0, 0], sizes = [8, 128], strides = [1, 1]} : vector<8x256xf32> to vector<8x128xf32>
    %177 = vector.extract_strided_slice %175 {offsets = [0, 128], sizes = [8, 128], strides = [1, 1]} : vector<8x256xf32> to vector<8x128xf32>
    %178 = arith.negf %176 : vector<8x128xf32>
    %179 = math.exp %178 : vector<8x128xf32>
    %cst_57 = arith.constant 1.000000e+00 : f32
    %180 = vector.broadcast %cst_57 : f32 to vector<8x128xf32>
    %181 = arith.addf %180, %179 : vector<8x128xf32>
    %182 = arith.divf %180, %181 : vector<8x128xf32>
    %183 = arith.mulf %176, %182 : vector<8x128xf32>
    %184 = arith.mulf %183, %177 : vector<8x128xf32>
    %185 = arith.truncf %184 : vector<8x128xf32> to vector<8x128xbf16>
    %c0_58 = arith.constant 0 : index
    %c0_59 = arith.constant 0 : index
    %186 = vector.load %arg9[%c0_58, %c0_59] : memref<128x32xbf16, #tpu.memory_space<vmem>>, vector<128x32xbf16>
    %cst_60 = arith.constant dense<0.000000e+00> : vector<8x32xf32>
    %187 = tpu.matmul %185, %186, %cst_60 {dimension_numbers = #tpu.dot_dimension_numbers<[1], [0], [0], [1], [0, 0, 1, 1], [], []>} : vector<8x128xbf16>, vector<128x32xbf16>, vector<8x32xf32> -> vector<8x32xf32>
    %188 = arith.addf %159, %187 : vector<8x32xf32>
    %c0_61 = arith.constant 0 : index
    %c0_62 = arith.constant 0 : index
    %c0_63 = arith.constant 0 : index
    %189 = vector.load %arg10[%c0_61, %c0_62, %c0_63] : memref<1x8x32xf32, #tpu.memory_space<vmem>>, vector<1x8x32xf32>
    %190 = vector.shape_cast %189 : vector<1x8x32xf32> to vector<8x32xf32>
    %191 = vector.shape_cast %188 : vector<8x32xf32> to vector<1x8x32xf32>
    tpu.vector_store %arg10[%c0_61, %c0_62, %c0_63], %191 {strides = array<i32>} : memref<1x8x32xf32, #tpu.memory_space<vmem>>, vector<1x8x32xf32>,
    return
  }
  func.func @transform_0(%arg0: i32) -> (i32, i32, i32) {
    %c0_i32 = arith.constant 0 : i32
    %c0_i32_0 = arith.constant 0 : i32
    %c0_i32_1 = arith.constant 0 : i32
    return %arg0, %c0_i32, %c0_i32_0 : i32, i32, i32
  }
  func.func @transform_1(%arg0: i32) -> (i32, i32) {
    %c0_i32 = arith.constant 0 : i32
    %c0_i32_0 = arith.constant 0 : i32
    %c0_i32_1 = arith.constant 0 : i32
    return %c0_i32, %c0_i32_0 : i32, i32
  }
  func.func @transform_2(%arg0: i32) -> (i32, i32) {
    %c0_i32 = arith.constant 0 : i32
    %c0_i32_0 = arith.constant 0 : i32
    %c0_i32_1 = arith.constant 0 : i32
    return %c0_i32, %c0_i32_0 : i32, i32
  }
  func.func @transform_3(%arg0: i32) -> (i32, i32) {
    %c0_i32 = arith.constant 0 : i32
    %c0_i32_0 = arith.constant 0 : i32
    %c0_i32_1 = arith.constant 0 : i32
    return %c0_i32, %c0_i32_0 : i32, i32
  }
  func.func @transform_4(%arg0: i32) -> (i32, i32) {
    %c0_i32 = arith.constant 0 : i32
    %c0_i32_0 = arith.constant 0 : i32
    %c0_i32_1 = arith.constant 0 : i32
    return %c0_i32, %c0_i32_0 : i32, i32
  }
  func.func @transform_5(%arg0: i32) -> (i32, i32) {
    %c0_i32 = arith.constant 0 : i32
    %c0_i32_0 = arith.constant 0 : i32
    %c0_i32_1 = arith.constant 0 : i32
    return %c0_i32, %c0_i32_0 : i32, i32
  }
  func.func @transform_6(%arg0: i32) -> (i32, i32) {
    %c0_i32 = arith.constant 0 : i32
    %c0_i32_0 = arith.constant 0 : i32
    %c0_i32_1 = arith.constant 0 : i32
    return %c0_i32, %c0_i32_0 : i32, i32
  }
  func.func @transform_7(%arg0: i32) -> (i32, i32) {
    %c0_i32 = arith.constant 0 : i32
    %c0_i32_0 = arith.constant 0 : i32
    %c0_i32_1 = arith.constant 0 : i32
    return %c0_i32, %c0_i32_0 : i32, i32
  }
  func.func @transform_8(%arg0: i32) -> (i32, i32) {
    %c0_i32 = arith.constant 0 : i32
    %c0_i32_0 = arith.constant 0 : i32
    %c0_i32_1 = arith.constant 0 : i32
    return %c0_i32, %c0_i32_0 : i32, i32
  }
  func.func @transform_9(%arg0: i32) -> (i32, i32, i32) {
    %c0_i32 = arith.constant 0 : i32
    %c0_i32_0 = arith.constant 0 : i32
    %c0_i32_1 = arith.constant 0 : i32
    return %arg0, %c0_i32, %c0_i32_0 : i32, i32, i32
  }
}

</mosaic_0001>

<llo_original>
// kernel: tpu_custom_call.1
$region0: #{tpu_custom_call.1}
  #allocation0 [shape = 'u32[]', space=smem, size = 0x4, offset = 0x4, fixed_abs, tag = 'smem constant byte address 0x4 - core index']
  #allocation1 [shape = 'u32[144,128]{1,0:T(1,128)}', space=vmem, size = 0x12000, scoped, tag = 'internal scratch']
  #allocation2 [shape = 'f32[8,32]{1,0:T(8,128)}', space=vmem, size = 0x1000, scoped, tag = 'scratch operand']
  %s0 = inlined_call_operand.hbm [shape: f32[2,8,32], index: 0, kind: input, shape index: {}]
  %s1 = inlined_call_operand.vmem [shape: f32[8,8], index: 1, kind: input, shape index: {}]
  %s2 = inlined_call_operand.hbm [shape: f32[8,8], index: 2, kind: input, shape index: {}]
  %s3 = inlined_call_operand.vmem [shape: f32[1,32], index: 3, kind: input, shape index: {}]
  %s4 = inlined_call_operand.vmem [shape: bf16[32,640], index: 4, kind: input, shape index: {}]
  %s5 = inlined_call_operand.hbm [shape: bf16[32,32], index: 5, kind: input, shape index: {}]
  %s6 = inlined_call_operand.vmem [shape: f32[1,32], index: 6, kind: input, shape index: {}]
  %s7 = inlined_call_operand.hbm [shape: bf16[32,256], index: 7, kind: input, shape index: {}]
  %s8 = inlined_call_operand.vmem [shape: bf16[128,32], index: 8, kind: input, shape index: {}]
  %s9 = inlined_call_operand.hbm [shape: f32[2,8,32], index: 9, kind: output, shape index: {}]
  %s10 = sld [smem:[#allocation0]]
  $region85: #{tpu_custom_call.1} parent=0
    _
  %s12 = ssub.s32 1, %s10
  %s13 = scalar_select 0, %s12, %s10
  $region1: #{tpu_custom_call.1} parent=0
    #allocation3 [shape = 'u8[8192]{0}', space=vmem, size = 0x2000, scoped, tag = 'input window, operand 0']
    #allocation4 [shape = 's32[2]{0}', space=sflag, size = 0x8, scoped, tag = 'scoped memory for tpu_custom_call.1']
    #allocation5 [shape = 's32[2]{0}', space=sflag, size = 0x8, scoped, tag = 'scoped memory for tpu_custom_call.1']
    #allocation6 [shape = 'u8[4096]{0}', space=vmem, size = 0x1000, scoped, tag = 'input window, operand 2, single buffered']
    #allocation7 [shape = 's32[1]{0}', space=sflag, size = 0x4, scoped, tag = 'scoped memory for tpu_custom_call.1']
    #allocation8 [shape = 'u8[8192]{0}', space=vmem, size = 0x2000, scoped, tag = 'input window, operand 5, single buffered']
    #allocation9 [shape = 'u8[16384]{0}', space=vmem, size = 0x4000, scoped, tag = 'input window, operand 7, single buffered']
    #allocation10 [shape = 's32[1]{0}', space=sflag, size = 0x4, scoped, tag = 'scoped memory for tpu_custom_call.1']
    #allocation11 [shape = 'u8[8192]{0}', space=vmem, size = 0x2000, scoped, tag = 'output window, operand 0']
    %14 = vsyncpa [#allocation4], 0
    %s15 = scalar_lea.sflag [#allocation4], 1
    %16 = vsyncpa %s15, 0
    %17 = vsyncpa [#allocation7], 0
    %18 = vsyncpa [#allocation10], 0
    %19 = vsyncpa [#allocation5], 0
    %s20 = scalar_lea.sflag [#allocation5], 1
    %21 = vsyncpa %s20, 0
    loop: start=0, step=1, limit=4
    $region2: #{tpu_custom_call.1} parent=1 // loop_pre_header
      _
    $region3: #{tpu_custom_call.1} parent=1 // loop_header
      %s23 = sphi 0, %s27
      %p24 = scmp.ge.s32.totalorder %s23, 4
      %s33 = sphi 0, %s35
      %s36 = sphi 0, %s33
      %s37 = sphi 0, %s36
      %s53 = sphi 0, %s37
      %s57 = sphi 0, %s57
      %s59 = sphi 0, %s57
      %s60 = sphi 0, %s59
      %s74 = sphi 0, %s60
      %s78 = sphi 0, %s78
      %s80 = sphi 0, %s78
      %s81 = sphi 0, %s80
      %s95 = sphi 0, %s81
      %s99 = sphi 0, %s99
      %s101 = sphi 0, %s99
      %s102 = sphi 0, %s101
      %s116 = sphi 0, %s102
      %s120 = sphi 0, %s120
      %s122 = sphi 0, %s120
      %s123 = sphi 0, %s122
      %s137 = sphi 0, %s123
      %s141 = sphi 0, %s141
      %s143 = sphi 0, %s141
      %s144 = sphi 0, %s143
      %s158 = sphi 0, %s144
      %s162 = sphi 0, %s162
      %s164 = sphi 0, %s162
      %s165 = sphi 0, %s164
      %s179 = sphi 0, %s165
      %s183 = sphi 0, %s183
      %s185 = sphi 0, %s183
      %s186 = sphi 0, %s185
      %s200 = sphi 0, %s186
      %s204 = sphi 0, %s204
      %s206 = sphi 0, %s204
      %s207 = sphi 0, %s206
      %s221 = sphi 0, %s207
      %s227 = sphi 0, %s229
      %s230 = sphi 0, %s227
      %s231 = sphi 0, %s230
      %s247 = sphi 0, %s231
    $region4: #{tpu_custom_call.1} parent=1 // loop_header_branch
      %26 = sbr.rel (%p24) target = $region8
    $region5: #{tpu_custom_call.1} parent=1 // loop_body
      %s28 = ssub.s32 %s23, 1
      %s29 = ssub.s32 %s23, 2
      %s30 = sadd.s32 %s23, 1
      %s31 = ssub.s32 %s23, %s30
      %p32 = scmp.eq.s32.totalorder %s31, 0
      %s34 = sadd.s32 %s33, 1
      %s35 = scalar_select %p32, %s33, %s34
      %p38 = pneg %p32
      %p39 = scmp.eq.s32.totalorder %s23, 1
      %p40 = por %p38, %p39
      %p41 = scmp.ne.s32.totalorder %s33, %s36
      %p42 = scmp.eq.s32.totalorder %s23, 0
      %p43 = por %p41, %p42
      %p44 = scmp.ne.s32.totalorder %s33, %s36
      %p45 = scmp.eq.s32.totalorder %s28, 1
      %p46 = por %p44, %p45
      %p47 = scmp.ne.s32.totalorder %s36, %s37
      %p48 = scmp.eq.s32.totalorder %s28, 0
      %p49 = por %p47, %p48
      %p50 = scmp.ne.s32.totalorder %s36, %s37
      %p51 = scmp.eq.s32.totalorder %s29, 1
      %p52 = por %p50, %p51
      %p54 = scmp.ne.s32.totalorder %s37, %s53
      %p55 = scmp.eq.s32.totalorder %s29, 0
      %p56 = por %p54, %p55
      %s58 = sadd.s32 %s57, 1
      %p61 = scmp.eq.s32.totalorder %s23, 1
      %p62 = scmp.ne.s32.totalorder %s57, %s59
      %p63 = scmp.eq.s32.totalorder %s23, 0
      %p64 = por %p62, %p63
      %p65 = scmp.ne.s32.totalorder %s57, %s59
      %p66 = scmp.eq.s32.totalorder %s28, 1
      %p67 = por %p65, %p66
      %p68 = scmp.ne.s32.totalorder %s59, %s60
      %p69 = scmp.eq.s32.totalorder %s28, 0
      %p70 = por %p68, %p69
      %p71 = scmp.ne.s32.totalorder %s59, %s60
      %p72 = scmp.eq.s32.totalorder %s29, 1
      %p73 = por %p71, %p72
      %p75 = scmp.ne.s32.totalorder %s60, %s74
      %p76 = scmp.eq.s32.totalorder %s29, 0
      %p77 = por %p75, %p76
      %s79 = sadd.s32 %s78, 1
      %p82 = scmp.eq.s32.totalorder %s23, 1
      %p83 = scmp.ne.s32.totalorder %s78, %s80
      %p84 = scmp.eq.s32.totalorder %s23, 0
      %p85 = por %p83, %p84
      %p86 = scmp.ne.s32.totalorder %s78, %s80
      %p87 = scmp.eq.s32.totalorder %s28, 1
      %p88 = por %p86, %p87
      %p89 = scmp.ne.s32.totalorder %s80, %s81
      %p90 = scmp.eq.s32.totalorder %s28, 0
      %p91 = por %p89, %p90
      %p92 = scmp.ne.s32.totalorder %s80, %s81
      %p93 = scmp.eq.s32.totalorder %s29, 1
      %p94 = por %p92, %p93
      %p96 = scmp.ne.s32.totalorder %s81, %s95
      %p97 = scmp.eq.s32.totalorder %s29, 0
      %p98 = por %p96, %p97
      %s100 = sadd.s32 %s99, 1
      %p103 = scmp.eq.s32.totalorder %s23, 1
      %p104 = scmp.ne.s32.totalorder %s99, %s101
      %p105 = scmp.eq.s32.totalorder %s23, 0
      %p106 = por %p104, %p105
      %p107 = scmp.ne.s32.totalorder %s99, %s101
      %p108 = scmp.eq.s32.totalorder %s28, 1
      %p109 = por %p107, %p108
      %p110 = scmp.ne.s32.totalorder %s101, %s102
      %p111 = scmp.eq.s32.totalorder %s28, 0
      %p112 = por %p110, %p111
      %p113 = scmp.ne.s32.totalorder %s101, %s102
      %p114 = scmp.eq.s32.totalorder %s29, 1
      %p115 = por %p113, %p114
      %p117 = scmp.ne.s32.totalorder %s102, %s116
      %p118 = scmp.eq.s32.totalorder %s29, 0
      %p119 = por %p117, %p118
      %s121 = sadd.s32 %s120, 1
      %p124 = scmp.eq.s32.totalorder %s23, 1
      %p125 = scmp.ne.s32.totalorder %s120, %s122
      %p126 = scmp.eq.s32.totalorder %s23, 0
      %p127 = por %p125, %p126
      %p128 = scmp.ne.s32.totalorder %s120, %s122
      %p129 = scmp.eq.s32.totalorder %s28, 1
      %p130 = por %p128, %p129
      %p131 = scmp.ne.s32.totalorder %s122, %s123
      %p132 = scmp.eq.s32.totalorder %s28, 0
      %p133 = por %p131, %p132
      %p134 = scmp.ne.s32.totalorder %s122, %s123
      %p135 = scmp.eq.s32.totalorder %s29, 1
      %p136 = por %p134, %p135
      %p138 = scmp.ne.s32.totalorder %s123, %s137
      %p139 = scmp.eq.s32.totalorder %s29, 0
      %p140 = por %p138, %p139
      %s142 = sadd.s32 %s141, 1
      %p145 = scmp.eq.s32.totalorder %s23, 1
      %p146 = scmp.ne.s32.totalorder %s141, %s143
      %p147 = scmp.eq.s32.totalorder %s23, 0
      %p148 = por %p146, %p147
      %p149 = scmp.ne.s32.totalorder %s141, %s143
      %p150 = scmp.eq.s32.totalorder %s28, 1
      %p151 = por %p149, %p150
      %p152 = scmp.ne.s32.totalorder %s143, %s144
      %p153 = scmp.eq.s32.totalorder %s28, 0
      %p154 = por %p152, %p153
      %p155 = scmp.ne.s32.totalorder %s143, %s144
      %p156 = scmp.eq.s32.totalorder %s29, 1
      %p157 = por %p155, %p156
      %p159 = scmp.ne.s32.totalorder %s144, %s158
      %p160 = scmp.eq.s32.totalorder %s29, 0
      %p161 = por %p159, %p160
      %s163 = sadd.s32 %s162, 1
      %p166 = scmp.eq.s32.totalorder %s23, 1
      %p167 = scmp.ne.s32.totalorder %s162, %s164
      %p168 = scmp.eq.s32.totalorder %s23, 0
      %p169 = por %p167, %p168
      %p170 = scmp.ne.s32.totalorder %s162, %s164
      %p171 = scmp.eq.s32.totalorder %s28, 1
      %p172 = por %p170, %p171
      %p173 = scmp.ne.s32.totalorder %s164, %s165
      %p174 = scmp.eq.s32.totalorder %s28, 0
      %p175 = por %p173, %p174
      %p176 = scmp.ne.s32.totalorder %s164, %s165
      %p177 = scmp.eq.s32.totalorder %s29, 1
      %p178 = por %p176, %p177
      %p180 = scmp.ne.s32.totalorder %s165, %s179
      %p181 = scmp.eq.s32.totalorder %s29, 0
      %p182 = por %p180, %p181
      %s184 = sadd.s32 %s183, 1
      %p187 = scmp.eq.s32.totalorder %s23, 1
      %p188 = scmp.ne.s32.totalorder %s183, %s185
      %p189 = scmp.eq.s32.totalorder %s23, 0
      %p190 = por %p188, %p189
      %p191 = scmp.ne.s32.totalorder %s183, %s185
      %p192 = scmp.eq.s32.totalorder %s28, 1
      %p193 = por %p191, %p192
      %p194 = scmp.ne.s32.totalorder %s185, %s186
      %p195 = scmp.eq.s32.totalorder %s28, 0
      %p196 = por %p194, %p195
      %p197 = scmp.ne.s32.totalorder %s185, %s186
      %p198 = scmp.eq.s32.totalorder %s29, 1
      %p199 = por %p197, %p198
      %p201 = scmp.ne.s32.totalorder %s186, %s200
      %p202 = scmp.eq.s32.totalorder %s29, 0
      %p203 = por %p201, %p202
      %s205 = sadd.s32 %s204, 1
      %p208 = scmp.eq.s32.totalorder %s23, 1
      %p209 = scmp.ne.s32.totalorder %s204, %s206
      %p210 = scmp.eq.s32.totalorder %s23, 0
      %p211 = por %p209, %p210
      %p212 = scmp.ne.s32.totalorder %s204, %s206
      %p213 = scmp.eq.s32.totalorder %s28, 1
      %p214 = por %p212, %p213
      %p215 = scmp.ne.s32.totalorder %s206, %s207
      %p216 = scmp.eq.s32.totalorder %s28, 0
      %p217 = por %p215, %p216
      %p218 = scmp.ne.s32.totalorder %s206, %s207
      %p219 = scmp.eq.s32.totalorder %s29, 1
      %p220 = por %p218, %p219
      %p222 = scmp.ne.s32.totalorder %s207, %s221
      %p223 = scmp.eq.s32.totalorder %s29, 0
      %p224 = por %p222, %p223
      %s225 = ssub.s32 %s23, %s30
      %p226 = scmp.eq.s32.totalorder %s225, 0
      %s228 = sadd.s32 %s227, 1
      %s229 = scalar_select %p226, %s227, %s228
      %p232 = pneg %p226
      %p233 = scmp.eq.s32.totalorder %s23, 1
      %p234 = por %p232, %p233
      %p235 = scmp.ne.s32.totalorder %s227, %s230
      %p236 = scmp.eq.s32.totalorder %s23, 0
      %p237 = por %p235, %p236
      %p238 = scmp.ne.s32.totalorder %s227, %s230
      %p239 = scmp.eq.s32.totalorder %s28, 1
      %p240 = por %p238, %p239
      %p241 = scmp.ne.s32.totalorder %s230, %s231
      %p242 = scmp.eq.s32.totalorder %s28, 0
      %p243 = por %p241, %p242
      %p244 = scmp.ne.s32.totalorder %s230, %s231
      %p245 = scmp.eq.s32.totalorder %s29, 1
      %p246 = por %p244, %p245
      %p248 = scmp.ne.s32.totalorder %s231, %s247
      %p249 = scmp.eq.s32.totalorder %s29, 0
      %p250 = por %p248, %p249
      %p251 = scmp.le.s32.totalorder 1, %s23
      %p252 = scmp.lt.s32.totalorder %s23, 3
      %p253 = pnand %p251, %p252
      %p254 = pneg %p253
      // Predicated region
      $region9: #{tpu_custom_call.1} parent=5 // pred_check
        _
      $region10: #{tpu_custom_call.1} parent=5 // pred_check_branch
        %256 = sbr.rel (%p253) target = $region12
      $region11: #{tpu_custom_call.1} parent=5 // pred_region
        %s257 = ssub.s32 %s23, 1
        // Predicated region
        $region13: #{tpu_custom_call.1} parent=11 // pred_check
          %p258 = pneg %p70
        $region14: #{tpu_custom_call.1} parent=11 // pred_check_branch
          %260 = sbr.rel (%p258) target = $region16
        $region15: #{tpu_custom_call.1} parent=11 // pred_region
          _
        $region16: #{tpu_custom_call.1} parent=11 // pred_fallthru
          _
        // Predicated region
        $region17: #{tpu_custom_call.1} parent=11 // pred_check
          %p261 = pneg %p91
        $region18: #{tpu_custom_call.1} parent=11 // pred_check_branch
          %263 = sbr.rel (%p261) target = $region20
        $region19: #{tpu_custom_call.1} parent=11 // pred_region
          %s265 = ssub.s32 128, 128
          %266 = vsyncadd [#allocation7], %s265
          %s268 = sshll.u32 [#allocation6], 4
          %s269 = int_to_ptr.vmem [resolvable:$true] %s268
          %271 = dma.hbm_to_vmem [thread:$0]  %s2, 128, %s269, [#allocation7]
        $region20: #{tpu_custom_call.1} parent=11 // pred_fallthru
          _
        // Predicated region
        $region21: #{tpu_custom_call.1} parent=11 // pred_check
          %p272 = pneg %p112
        $region22: #{tpu_custom_call.1} parent=11 // pred_check_branch
          %274 = sbr.rel (%p272) target = $region24
        $region23: #{tpu_custom_call.1} parent=11 // pred_region
          _
        $region24: #{tpu_custom_call.1} parent=11 // pred_fallthru
          _
        // Predicated region
        $region25: #{tpu_custom_call.1} parent=11 // pred_check
          %p275 = pneg %p133
        $region26: #{tpu_custom_call.1} parent=11 // pred_check_branch
          %277 = sbr.rel (%p275) target = $region28
        $region27: #{tpu_custom_call.1} parent=11 // pred_region
          _
        $region28: #{tpu_custom_call.1} parent=11 // pred_fallthru
          _
        // Predicated region
        $region29: #{tpu_custom_call.1} parent=11 // pred_check
          %p278 = pneg %p154
        $region30: #{tpu_custom_call.1} parent=11 // pred_check_branch
          %280 = sbr.rel (%p278) target = $region32
        $region31: #{tpu_custom_call.1} parent=11 // pred_region
          %s282 = ssub.s32 256, 256
          %283 = vsyncadd [#allocation7], %s282
          %s284 = sshll.u32 [#allocation8], 4
          %s285 = int_to_ptr.vmem [resolvable:$true] %s284
          %290 = dma.hbm_to_vmem [thread:$0]  %s5, 256, %s285, [#allocation7], 64, 64, 4
        $region32: #{tpu_custom_call.1} parent=11 // pred_fallthru
          _
        // Predicated region
        $region33: #{tpu_custom_call.1} parent=11 // pred_check
          %p291 = pneg %p175
        $region34: #{tpu_custom_call.1} parent=11 // pred_check_branch
          %293 = sbr.rel (%p291) target = $region36
        $region35: #{tpu_custom_call.1} parent=11 // pred_region
          _
        $region36: #{tpu_custom_call.1} parent=11 // pred_fallthru
          _
        // Predicated region
        $region37: #{tpu_custom_call.1} parent=11 // pred_check
          %p294 = pneg %p196
        $region38: #{tpu_custom_call.1} parent=11 // pred_check_branch
          %296 = sbr.rel (%p294) target = $region40
        $region39: #{tpu_custom_call.1} parent=11 // pred_region
          %s298 = ssub.s32 512, 512
          %299 = vsyncadd [#allocation10], %s298
          %s300 = sshll.u32 [#allocation9], 4
          %s301 = int_to_ptr.vmem [resolvable:$true] %s300
          %306 = dma.hbm_to_vmem [thread:$0]  %s7, 512, %s301, [#allocation10], 128, 128, 8
        $region40: #{tpu_custom_call.1} parent=11 // pred_fallthru
          _
        // Predicated region
        $region41: #{tpu_custom_call.1} parent=11 // pred_check
          %p307 = pneg %p217
        $region42: #{tpu_custom_call.1} parent=11 // pred_check_branch
          %309 = sbr.rel (%p307) target = $region44
        $region43: #{tpu_custom_call.1} parent=11 // pred_region
          _
        $region44: #{tpu_custom_call.1} parent=11 // pred_fallthru
          _
      $region12: #{tpu_custom_call.1} parent=5 // pred_fallthru
        _
      %p310 = scmp.lt.s32.totalorder %s23, 2
      // Predicated region
      $region45: #{tpu_custom_call.1} parent=5 // pred_check
        %p311 = pneg %p310
      $region46: #{tpu_custom_call.1} parent=5 // pred_check_branch
        %313 = sbr.rel (%p311) target = $region48
      $region47: #{tpu_custom_call.1} parent=5 // pred_region
        // Predicated region
        $region49: #{tpu_custom_call.1} parent=47 // pred_check
          %p314 = pneg %p43
        $region50: #{tpu_custom_call.1} parent=47 // pred_check_branch
          %316 = sbr.rel (%p314) target = $region52
        $region51: #{tpu_custom_call.1} parent=47 // pred_region
          %s317 = sand.u32 %s33, 1
          %s318 = scalar_lea.sflag [#allocation4], %s317
          %s319 = sand.u32 %s33, 1
          %s320 = smul.addr %s319, 8
          %s321 = scalar_lea.vmem [#allocation3], %s320
          %s323 = ssub.s32 128, 128
          %324 = vsyncadd %s318, %s323
          %s325 = smul.addr %s23, 128
          %s326 = scalar_lea.hbm %s0, %s325
          %s328 = sshll.u32 %s321, 4
          %s329 = int_to_ptr.vmem [resolvable:$true] %s328
          %331 = dma.hbm_to_vmem [thread:$0]  %s326, 128, %s329, %s318
        $region52: #{tpu_custom_call.1} parent=47 // pred_fallthru
          _
      $region48: #{tpu_custom_call.1} parent=5 // pred_fallthru
        _
      %p332 = scmp.le.s32.totalorder 1, %s23
      %p333 = scmp.lt.s32.totalorder %s23, 3
      %p334 = pnand %p332, %p333
      %p335 = pneg %p334
      // Predicated region
      $region53: #{tpu_custom_call.1} parent=5 // pred_check
        _
      $region54: #{tpu_custom_call.1} parent=5 // pred_check_branch
        %337 = sbr.rel (%p334) target = $region56
      $region55: #{tpu_custom_call.1} parent=5 // pred_region
        %s338 = ssub.s32 %s23, 1
        %s339 = sand.u32 %s36, 1
        %s340 = scalar_lea.sflag [#allocation4], %s339
        %s341 = sand.u32 %s36, 1
        %s342 = smul.addr %s341, 8
        %s343 = scalar_lea.vmem [#allocation3], %s342
        // Predicated region
        $region57: #{tpu_custom_call.1} parent=55 // pred_check
          %p344 = pneg %p49
        $region58: #{tpu_custom_call.1} parent=55 // pred_check_branch
          %346 = sbr.rel (%p344) target = $region60
        $region59: #{tpu_custom_call.1} parent=55 // pred_region
          %347 = dma.done %s340, 128
        $region60: #{tpu_custom_call.1} parent=55 // pred_fallthru
          _
        // Predicated region
        $region61: #{tpu_custom_call.1} parent=55 // pred_check
          %p348 = pneg %p91
        $region62: #{tpu_custom_call.1} parent=55 // pred_check_branch
          %350 = sbr.rel (%p348) target = $region64
        $region63: #{tpu_custom_call.1} parent=55 // pred_region
          %351 = dma.done [#allocation7], 128
        $region64: #{tpu_custom_call.1} parent=55 // pred_fallthru
          _
        // Predicated region
        $region65: #{tpu_custom_call.1} parent=55 // pred_check
          %p352 = pneg %p154
        $region66: #{tpu_custom_call.1} parent=55 // pred_check_branch
          %354 = sbr.rel (%p352) target = $region68
        $region67: #{tpu_custom_call.1} parent=55 // pred_region
          %355 = dma.done [#allocation7], 256
        $region68: #{tpu_custom_call.1} parent=55 // pred_fallthru
          _
        // Predicated region
        $region69: #{tpu_custom_call.1} parent=55 // pred_check
          %p356 = pneg %p196
        $region70: #{tpu_custom_call.1} parent=55 // pred_check_branch
          %358 = sbr.rel (%p356) target = $region72
        $region71: #{tpu_custom_call.1} parent=55 // pred_region
          %359 = dma.done [#allocation10], 512
        $region72: #{tpu_custom_call.1} parent=55 // pred_fallthru
          _
        %s360 = sand.u32 %s36, 1
        %s361 = scalar_lea.sflag [#allocation4], %s360
        %s362 = sand.u32 %s36, 1
        %s363 = smul.addr %s362, 8
        %s364 = scalar_lea.vmem [#allocation3], %s363
        %p365 = pneg %p49
        %p366 = pneg %p46
        %p367 = pneg %p70
        %p368 = pneg %p67
        %p369 = pneg %p91
        %p370 = pneg %p88
        %p371 = pneg %p112
        %p372 = pneg %p109
        %p373 = pneg %p133
        %p374 = pneg %p130
        %p375 = pneg %p154
        %p376 = pneg %p151
        %p377 = pneg %p175
        %p378 = pneg %p172
        %p379 = pneg %p196
        %p380 = pneg %p193
        %p381 = pneg %p217
        %p382 = pneg %p214
        %p383 = pneg %p243
        %p384 = pneg %p240
        %s385 = sand.u32 %s230, 1
        %s386 = scalar_lea.sflag [#allocation5], %s385
        %s387 = sand.u32 %s230, 1
        %s388 = smul.addr %s387, 8
        %s389 = scalar_lea.vmem [#allocation11], %s388
        %v391 = vld [vmem:[%s343] sm:$0xff]
        %v392 = vlaneseq
        %v393 = vshrl.u32 %v392, 7
        %v394 = vlaneseq
        %v395 = vand.u32 %v394, 127
        %vm396 = vcmp.le.s32.totalorder %v395, %v393
        %v397 = vsel %vm396, 0.0, -1e+30
        %v398 = vld [vmem:[%s3] sm:$0x1]
        %v399 = vmul.f32 %v391, %v391
        %vm400 = vcmask 261120
        %v401 = vsel %vm400, %v399, 0.0
        %402 = vadd.xlane.f32.xlu0 %v401
        %v403 = vpop.xlane.xlu0 %402
        %v404 = vrcp.pop 32.0
        %v405 = vmul.f32 %v403, %v404
        %v406 = vadd.f32 %v405, 1e-06
        %v407 = vrsqrt.pop %v406
        %v408 = vmul.f32 %v391, %v407
        %v410 = vlaneseq
        %v411 = vshrl.u32 %v410, 7
        %v412 = vsub.s32 0, %v411
        %v413 = vrot.slane %v398, %v412
        %v415 = vmul.f32 %v408, %v413
        %v416 = vpack.c.bf16 %v415, %v415
        %v417 = vld [vmem:[%s4] sm:$0xff]
        %v418 = vld [vmem:[%s4 + $0x8] sm:$0xff]
        %v419 = vld [vmem:[%s4 + $0x10] sm:$0xf]
        %v420 = vld [vmem:[%s4 + $0x14] sm:$0xff]
        %v421 = vld [vmem:[%s4 + $0x1c] sm:$0xff]
        %v422 = vld [vmem:[%s4 + $0x24] sm:$0xf]
        %v423 = vld [vmem:[%s4 + $0x28] sm:$0xff]
        %v424 = vld [vmem:[%s4 + $0x30] sm:$0xff]
        %v425 = vld [vmem:[%s4 + $0x38] sm:$0xf]
        %v426 = vld [vmem:[%s4 + $0x3c] sm:$0xff]
        %v427 = vld [vmem:[%s4 + $0x44] sm:$0xff]
        %v428 = vld [vmem:[%s4 + $0x4c] sm:$0xf]
        %v441 = vunpack.c.l.b16 %v417
        %v442 = vunpack.c.h.b16 %v417
        %v443 = vunpack.c.l.b16 %v418
        %v444 = vunpack.c.h.b16 %v418
        %v445 = vunpack.c.l.b16 %v419
        %v446 = vunpack.c.l.b16 %v420
        %v447 = vunpack.c.h.b16 %v420
        %v448 = vunpack.c.l.b16 %v421
        %v449 = vunpack.c.h.b16 %v421
        %v450 = vunpack.c.l.b16 %v422
        %v451 = vunpack.c.l.b16 %v423
        %v452 = vunpack.c.h.b16 %v423
        %v453 = vunpack.c.l.b16 %v424
        %v454 = vunpack.c.h.b16 %v424
        %v455 = vunpack.c.l.b16 %v425
        %v456 = vunpack.c.l.b16 %v426
        %v457 = vunpack.c.h.b16 %v426
        %v458 = vunpack.c.l.b16 %v427
        %v459 = vunpack.c.h.b16 %v427
        %v460 = vunpack.c.l.b16 %v428
        %v461 = vpack.c.b16 %v446, %v441
        %v462 = vpack.c.b16 %v447, %v442
        %v463 = vpack.c.b16 %v448, %v443
        %v464 = vpack.c.b16 %v449, %v444
        %v465 = vpack.c.b16 %v450, %v445
        %v466 = vpack.c.b16 %v456, %v451
        %v467 = vpack.c.b16 %v457, %v452
        %v468 = vpack.c.b16 %v458, %v453
        %v469 = vpack.c.b16 %v459, %v454
        %v470 = vpack.c.b16 %v460, %v455
        %v482 = vsel %vm400, %v416, 0
        %484 = vmatprep.subr.bf16.mxu0 %v462
        %485 = vmatpush1.bf16.msra.mxu0 %v461
        %486 = vmatprep.subr.bf16.mxu0 %v467
        %487 = vmatpush1.bf16.msra.mxu0 %v466
        %488 = vmatprep.subr.bf16.mxu0 0
        %489 = vmatpush1.bf16.msra.mxu0 0
        %490 = vmatprep.subr.bf16.mxu0 0
        %491 = vmatpush1.bf16.msra.mxu0 0
        %492 = vmatprep.subr.bf16.mxu0 0
        %493 = vmatpush1.bf16.msra.mxu0 0
        %494 = vmatprep.subr.bf16.mxu0 0
        %495 = vmatpush1.bf16.msra.mxu0 0
        %496 = vmatprep.subr.bf16.mxu0 0
        %497 = vmatpush1.bf16.msra.mxu0 0
        %498 = vmatprep.subr.bf16.mxu0 0
        %499 = vmatpush1.bf16.msra.mxu0 0
        %500 = vmatprep.subr.bf16.mxu0 0
        %501 = vmatpush1.bf16.msra.mxu0 0
        %502 = vmatprep.subr.bf16.mxu0 0
        %503 = vmatpush1.bf16.msra.mxu0 0
        %504 = vmatprep.subr.bf16.mxu0 0
        %505 = vmatpush1.bf16.msra.mxu0 0
        %506 = vmatprep.subr.bf16.mxu0 0
        %507 = vmatpush1.bf16.msra.mxu0 0
        %508 = vmatprep.subr.bf16.mxu0 0
        %509 = vmatpush1.bf16.msra.mxu0 0
        %510 = vmatprep.subr.bf16.mxu0 0
        %511 = vmatpush1.bf16.msra.mxu0 0
        %512 = vmatprep.subr.bf16.mxu0 0
        %513 = vmatpush1.bf16.msra.mxu0 0
        %514 = vmatprep.subr.bf16.mxu0 0
        %515 = vmatpush1.bf16.msra.mxu0 0
        %516 = vmatprep.mubr.bf16.mxu0 0
        %517 = vmatmul.mubr.bf16.gmra.mrb[0].mxu0 %v482
        %v518 = vpop.f32.mrb[0].mxu0
        %v519 = vadd.f32 0.0, %v518
        %v520 = vpop.f32.mrb[0].mxu0
        %v521 = vadd.f32 0.0, %v520
        %v522 = vpop.f32.mrb[0].mxu0
        %v523 = vpop.f32.mrb[0].mxu0
        %524 = vdwg.mxu0
        %525 = vmatprep.subr.bf16.mxu0 %v464
        %526 = vmatpush1.bf16.msra.mxu0 %v463
        %527 = vmatprep.subr.bf16.mxu0 %v469
        %528 = vmatpush1.bf16.msra.mxu0 %v468
        %529 = vmatprep.subr.bf16.mxu0 0
        %530 = vmatpush1.bf16.msra.mxu0 0
        %531 = vmatprep.subr.bf16.mxu0 0
        %532 = vmatpush1.bf16.msra.mxu0 0
        %533 = vmatprep.subr.bf16.mxu0 0
        %534 = vmatpush1.bf16.msra.mxu0 0
        %535 = vmatprep.subr.bf16.mxu0 0
        %536 = vmatpush1.bf16.msra.mxu0 0
        %537 = vmatprep.subr.bf16.mxu0 0
        %538 = vmatpush1.bf16.msra.mxu0 0
        %539 = vmatprep.subr.bf16.mxu0 0
        %540 = vmatpush1.bf16.msra.mxu0 0
        %541 = vmatprep.subr.bf16.mxu0 0
        %542 = vmatpush1.bf16.msra.mxu0 0
        %543 = vmatprep.subr.bf16.mxu0 0
        %544 = vmatpush1.bf16.msra.mxu0 0
        %545 = vmatprep.subr.bf16.mxu0 0
        %546 = vmatpush1.bf16.msra.mxu0 0
        %547 = vmatprep.subr.bf16.mxu0 0
        %548 = vmatpush1.bf16.msra.mxu0 0
        %549 = vmatprep.subr.bf16.mxu0 0
        %550 = vmatpush1.bf16.msra.mxu0 0
        %551 = vmatprep.subr.bf16.mxu0 0
        %552 = vmatpush1.bf16.msra.mxu0 0
        %553 = vmatprep.subr.bf16.mxu0 0
        %554 = vmatpush1.bf16.msra.mxu0 0
        %555 = vmatprep.subr.bf16.mxu0 0
        %556 = vmatpush1.bf16.msra.mxu0 0
        %557 = vmatprep.mubr.bf16.mxu0 0
        %558 = vmatmul.mubr.bf16.gmra.mrb[0].mxu0 %v482
        %v559 = vpop.f32.mrb[0].mxu0
        %v560 = vadd.f32 0.0, %v559
        %v561 = vpop.f32.mrb[0].mxu0
        %v562 = vadd.f32 0.0, %v561
        %v563 = vpop.f32.mrb[0].mxu0
        %v564 = vpop.f32.mrb[0].mxu0
        %565 = vdwg.mxu0
        %566 = vmatprep.subr.bf16.mxu0 0
        %567 = vmatpush1.bf16.msra.mxu0 %v465
        %568 = vmatprep.subr.bf16.mxu0 0
        %569 = vmatpush1.bf16.msra.mxu0 %v470
        %570 = vmatprep.subr.bf16.mxu0 0
        %571 = vmatpush1.bf16.msra.mxu0 0
        %572 = vmatprep.subr.bf16.mxu0 0
        %573 = vmatpush1.bf16.msra.mxu0 0
        %574 = vmatprep.subr.bf16.mxu0 0
        %575 = vmatpush1.bf16.msra.mxu0 0
        %576 = vmatprep.subr.bf16.mxu0 0
        %577 = vmatpush1.bf16.msra.mxu0 0
        %578 = vmatprep.subr.bf16.mxu0 0
        %579 = vmatpush1.bf16.msra.mxu0 0
        %580 = vmatprep.subr.bf16.mxu0 0
        %581 = vmatpush1.bf16.msra.mxu0 0
        %582 = vmatprep.subr.bf16.mxu0 0
        %583 = vmatpush1.bf16.msra.mxu0 0
        %584 = vmatprep.subr.bf16.mxu0 0
        %585 = vmatpush1.bf16.msra.mxu0 0
        %586 = vmatprep.subr.bf16.mxu0 0
        %587 = vmatpush1.bf16.msra.mxu0 0
        %588 = vmatprep.subr.bf16.mxu0 0
        %589 = vmatpush1.bf16.msra.mxu0 0
        %590 = vmatprep.subr.bf16.mxu0 0
        %591 = vmatpush1.bf16.msra.mxu0 0
        %592 = vmatprep.subr.bf16.mxu0 0
        %593 = vmatpush1.bf16.msra.mxu0 0
        %594 = vmatprep.subr.bf16.mxu0 0
        %595 = vmatpush1.bf16.msra.mxu0 0
        %596 = vmatprep.subr.bf16.mxu0 0
        %597 = vmatpush1.bf16.msra.mxu0 0
        %598 = vmatprep.mubr.bf16.mxu0 0
        %599 = vmatmul.mubr.bf16.gmra.mrb[0].mxu0 %v482
        %v600 = vpop.f32.mrb[0].mxu0
        %v601 = vadd.f32 0.0, %v600
        %v602 = vpop.f32.mrb[0].mxu0
        %v603 = vpop.f32.mrb[0].mxu0
        %v604 = vpop.f32.mrb[0].mxu0
        %605 = vdwg.mxu0
        %v606 = vld [vmem:[%s1] sm:$0xff]
        %v607 = vld [vmem:[#allocation6] sm:$0xff]
        %v608 = vmul.f32 %v521, %v606
        %v609 = vmul.f32 %v601, %v607
        %v610 = vadd.f32 %v608, %v609
        %v611 = vpack.c.bf16 %v610, %v610
        %v612 = vpack.c.bf16 %v560, %v560
        %614 = vrot.lane.b32.xlu0 %v606, 8
        %v615 = vpop.permute.xlu0 %614
        %v617 = vmul.f32 %v521, %v615
        %619 = vrot.lane.b32.xlu0 %v607, 8
        %v620 = vpop.permute.xlu0 %619
        %v622 = vmul.f32 %v601, %v620
        %v623 = vadd.f32 %v617, %v622
        %v624 = vpack.c.bf16 %v623, %v623
        %v625 = vmul.f32 %v519, %v606
        %v626 = vmul.f32 %v562, %v607
        %v627 = vadd.f32 %v625, %v626
        %v628 = vpack.c.bf16 %v627, %v627
        %vm629 = vcmask 64512
        %v631 = vsel %vm629, %v628, 0
        %v634 = vsel %vm629, %v611, 0
        %636 = vmatprep.subr.bf16.mxu0 0
        %637 = vmatpush1.bf16.xpose.msra.mxu0 %v634
        %638 = vmatprep.subr.bf16.mxu0 0
        %639 = vmatpush1.bf16.xpose.msra.mxu0 0
        %640 = vmatprep.subr.bf16.mxu0 0
        %641 = vmatpush1.bf16.xpose.msra.mxu0 0
        %642 = vmatprep.subr.bf16.mxu0 0
        %643 = vmatpush1.bf16.xpose.msra.mxu0 0
        %644 = vmatprep.subr.bf16.mxu0 0
        %645 = vmatpush1.bf16.xpose.msra.mxu0 0
        %646 = vmatprep.subr.bf16.mxu0 0
        %647 = vmatpush1.bf16.xpose.msra.mxu0 0
        %648 = vmatprep.subr.bf16.mxu0 0
        %649 = vmatpush1.bf16.xpose.msra.mxu0 0
        %650 = vmatprep.subr.bf16.mxu0 0
        %651 = vmatpush1.bf16.xpose.msra.mxu0 0
        %652 = vmatprep.subr.bf16.mxu0 0
        %653 = vmatpush1.bf16.xpose.msra.mxu0 0
        %654 = vmatprep.subr.bf16.mxu0 0
        %655 = vmatpush1.bf16.xpose.msra.mxu0 0
        %656 = vmatprep.subr.bf16.mxu0 0
        %657 = vmatpush1.bf16.xpose.msra.mxu0 0
        %658 = vmatprep.subr.bf16.mxu0 0
        %659 = vmatpush1.bf16.xpose.msra.mxu0 0
        %660 = vmatprep.subr.bf16.mxu0 0
        %661 = vmatpush1.bf16.xpose.msra.mxu0 0
        %662 = vmatprep.subr.bf16.mxu0 0
        %663 = vmatpush1.bf16.xpose.msra.mxu0 0
        %664 = vmatprep.subr.bf16.mxu0 0
        %665 = vmatpush1.bf16.xpose.msra.mxu0 0
        %666 = vmatprep.subr.bf16.mxu0 0
        %667 = vmatpush1.bf16.xpose.msra.mxu0 0
        %668 = vmatprep.mubr.bf16.mxu0 0
        %669 = vmatmul.mubr.bf16.gmra.mrb[0].mxu0 %v631
        %v670 = vpop.f32.mrb[0].mxu0
        %v671 = vadd.f32 0.0, %v670
        %v672 = vpop.f32.mrb[0].mxu0
        %v673 = vpop.f32.mrb[0].mxu0
        %v674 = vpop.f32.mrb[0].mxu0
        %675 = vdwg.mxu0
        %v676 = vmul.f32 %v671, 0.35355338
        %v677 = vadd.f32 %v676, %v397
        %v678 = vsel %vm629, %v677, -inf
        %679 = vmax.xlane.f32.xlu0 %v678
        %v680 = vpop.xlane.xlu0 %679
        %v681 = vsub.f32 %v677, %v680
        %v682 = vmul.f32 %v681, 1.442695
        %v683 = vpow.pop %v682
        %v684 = vsel %vm629, %v683, 0.0
        %685 = vadd.xlane.f32.xlu0 %v684
        %v686 = vpop.xlane.xlu0 %685
        %v687 = vrcp.pop %v686
        %v688 = vmul.f32 %v686, %v687
        %v689 = vsub.f32 2.0, %v688
        %v690 = vmul.f32 %v687, %v689
        %v691 = vmul.f32 %v683, %v690
        %v692 = vpack.c.bf16 %v691, %v691
        %v694 = vsel %vm629, %v692, 0
        %vm696 = vcmask 1043456
        %v698 = vsel %vm696, %v612, 0
        %700 = vmatprep.subr.bf16.mxu0 0
        %701 = vmatpush1.bf16.msra.mxu0 %v698
        %702 = vmatprep.subr.bf16.mxu0 0
        %703 = vmatpush1.bf16.msra.mxu0 0
        %704 = vmatprep.subr.bf16.mxu0 0
        %705 = vmatpush1.bf16.msra.mxu0 0
        %706 = vmatprep.subr.bf16.mxu0 0
        %707 = vmatpush1.bf16.msra.mxu0 0
        %708 = vmatprep.subr.bf16.mxu0 0
        %709 = vmatpush1.bf16.msra.mxu0 0
        %710 = vmatprep.subr.bf16.mxu0 0
        %711 = vmatpush1.bf16.msra.mxu0 0
        %712 = vmatprep.subr.bf16.mxu0 0
        %713 = vmatpush1.bf16.msra.mxu0 0
        %714 = vmatprep.subr.bf16.mxu0 0
        %715 = vmatpush1.bf16.msra.mxu0 0
        %716 = vmatprep.subr.bf16.mxu0 0
        %717 = vmatpush1.bf16.msra.mxu0 0
        %718 = vmatprep.subr.bf16.mxu0 0
        %719 = vmatpush1.bf16.msra.mxu0 0
        %720 = vmatprep.subr.bf16.mxu0 0
        %721 = vmatpush1.bf16.msra.mxu0 0
        %722 = vmatprep.subr.bf16.mxu0 0
        %723 = vmatpush1.bf16.msra.mxu0 0
        %724 = vmatprep.subr.bf16.mxu0 0
        %725 = vmatpush1.bf16.msra.mxu0 0
        %726 = vmatprep.subr.bf16.mxu0 0
        %727 = vmatpush1.bf16.msra.mxu0 0
        %728 = vmatprep.subr.bf16.mxu0 0
        %729 = vmatpush1.bf16.msra.mxu0 0
        %730 = vmatprep.subr.bf16.mxu0 0
        %731 = vmatpush1.bf16.msra.mxu0 0
        %732 = vmatprep.mubr.bf16.mxu0 0
        %733 = vmatmul.mubr.bf16.gmra.mrb[0].mxu0 %v694
        %v734 = vpop.f32.mrb[0].mxu0
        %v735 = vadd.f32 0.0, %v734
        %v736 = vpop.f32.mrb[0].mxu0
        %v737 = vpop.f32.mrb[0].mxu0
        %v738 = vpop.f32.mrb[0].mxu0
        %739 = vdwg.mxu0
        %740 = vst.msk [vmem:[#allocation2] sm:$0xff] %vm629, %v735
        %v741 = vmul.f32 %v519, %v615
        %v742 = vmul.f32 %v562, %v620
        %v743 = vadd.f32 %v741, %v742
        %v744 = vpack.c.bf16 %v743, %v743
        %746 = vrot.lane.b32.xlu0 %v744, 120
        %v747 = vpop.permute.xlu0 %746
        %v749 = vsel %vm629, %v747, 0
        %751 = vmatprep.subr.bf16.mxu0 0
        %752 = vmatpush1.bf16.xpose.msra.mxu0 %v634
        %753 = vmatprep.subr.bf16.mxu0 0
        %754 = vmatpush1.bf16.xpose.msra.mxu0 0
        %755 = vmatprep.subr.bf16.mxu0 0
        %756 = vmatpush1.bf16.xpose.msra.mxu0 0
        %757 = vmatprep.subr.bf16.mxu0 0
        %758 = vmatpush1.bf16.xpose.msra.mxu0 0
        %759 = vmatprep.subr.bf16.mxu0 0
        %760 = vmatpush1.bf16.xpose.msra.mxu0 0
        %761 = vmatprep.subr.bf16.mxu0 0
        %762 = vmatpush1.bf16.xpose.msra.mxu0 0
        %763 = vmatprep.subr.bf16.mxu0 0
        %764 = vmatpush1.bf16.xpose.msra.mxu0 0
        %765 = vmatprep.subr.bf16.mxu0 0
        %766 = vmatpush1.bf16.xpose.msra.mxu0 0
        %767 = vmatprep.subr.bf16.mxu0 0
        %768 = vmatpush1.bf16.xpose.msra.mxu0 0
        %769 = vmatprep.subr.bf16.mxu0 0
        %770 = vmatpush1.bf16.xpose.msra.mxu0 0
        %771 = vmatprep.subr.bf16.mxu0 0
        %772 = vmatpush1.bf16.xpose.msra.mxu0 0
        %773 = vmatprep.subr.bf16.mxu0 0
        %774 = vmatpush1.bf16.xpose.msra.mxu0 0
        %775 = vmatprep.subr.bf16.mxu0 0
        %776 = vmatpush1.bf16.xpose.msra.mxu0 0
        %777 = vmatprep.subr.bf16.mxu0 0
        %778 = vmatpush1.bf16.xpose.msra.mxu0 0
        %779 = vmatprep.subr.bf16.mxu0 0
        %780 = vmatpush1.bf16.xpose.msra.mxu0 0
        %781 = vmatprep.subr.bf16.mxu0 0
        %782 = vmatpush1.bf16.xpose.msra.mxu0 0
        %783 = vmatprep.mubr.bf16.mxu0 0
        %784 = vmatmul.mubr.bf16.gmra.mrb[0].mxu0 %v749
        %v785 = vpop.f32.mrb[0].mxu0
        %v786 = vadd.f32 0.0, %v785
        %v787 = vpop.f32.mrb[0].mxu0
        %v788 = vpop.f32.mrb[0].mxu0
        %v789 = vpop.f32.mrb[0].mxu0
        %790 = vdwg.mxu0
        %v791 = vmul.f32 %v786, 0.35355338
        %v792 = vadd.f32 %v791, %v397
        %v793 = vsel %vm629, %v792, -inf
        %794 = vmax.xlane.f32.xlu0 %v793
        %v795 = vpop.xlane.xlu0 %794
        %v796 = vsub.f32 %v792, %v795
        %v797 = vmul.f32 %v796, 1.442695
        %v798 = vpow.pop %v797
        %v799 = vsel %vm629, %v798, 0.0
        %800 = vadd.xlane.f32.xlu0 %v799
        %v801 = vpop.xlane.xlu0 %800
        %v802 = vrcp.pop %v801
        %v803 = vmul.f32 %v801, %v802
        %v804 = vsub.f32 2.0, %v803
        %v805 = vmul.f32 %v802, %v804
        %v806 = vmul.f32 %v798, %v805
        %v807 = vpack.c.bf16 %v806, %v806
        %v809 = vsel %vm629, %v807, 0
        %811 = vmatprep.subr.bf16.mxu0 0
        %812 = vmatpush1.bf16.msra.mxu0 %v698
        %813 = vmatprep.subr.bf16.mxu0 0
        %814 = vmatpush1.bf16.msra.mxu0 0
        %815 = vmatprep.subr.bf16.mxu0 0
        %816 = vmatpush1.bf16.msra.mxu0 0
        %817 = vmatprep.subr.bf16.mxu0 0
        %818 = vmatpush1.bf16.msra.mxu0 0
        %819 = vmatprep.subr.bf16.mxu0 0
        %820 = vmatpush1.bf16.msra.mxu0 0
        %821 = vmatprep.subr.bf16.mxu0 0
        %822 = vmatpush1.bf16.msra.mxu0 0
        %823 = vmatprep.subr.bf16.mxu0 0
        %824 = vmatpush1.bf16.msra.mxu0 0
        %825 = vmatprep.subr.bf16.mxu0 0
        %826 = vmatpush1.bf16.msra.mxu0 0
        %827 = vmatprep.subr.bf16.mxu0 0
        %828 = vmatpush1.bf16.msra.mxu0 0
        %829 = vmatprep.subr.bf16.mxu0 0
        %830 = vmatpush1.bf16.msra.mxu0 0
        %831 = vmatprep.subr.bf16.mxu0 0
        %832 = vmatpush1.bf16.msra.mxu0 0
        %833 = vmatprep.subr.bf16.mxu0 0
        %834 = vmatpush1.bf16.msra.mxu0 0
        %835 = vmatprep.subr.bf16.mxu0 0
        %836 = vmatpush1.bf16.msra.mxu0 0
        %837 = vmatprep.subr.bf16.mxu0 0
        %838 = vmatpush1.bf16.msra.mxu0 0
        %839 = vmatprep.subr.bf16.mxu0 0
        %840 = vmatpush1.bf16.msra.mxu0 0
        %841 = vmatprep.subr.bf16.mxu0 0
        %842 = vmatpush1.bf16.msra.mxu0 0
        %843 = vmatprep.mubr.bf16.mxu0 0
        %844 = vmatmul.mubr.bf16.gmra.mrb[0].mxu0 %v809
        %v845 = vpop.f32.mrb[0].mxu0
        %v846 = vadd.f32 0.0, %v845
        %v847 = vpop.f32.mrb[0].mxu0
        %v848 = vpop.f32.mrb[0].mxu0
        %v849 = vpop.f32.mrb[0].mxu0
        %850 = vdwg.mxu0
        %852 = vrot.lane.b32.xlu0 %v846, 8
        %v853 = vpop.permute.xlu0 %852
        %vm855 = vcmask 130112
        %856 = vst.msk [vmem:[#allocation2] sm:$0xff] %vm855, %v853
        %857 = vrot.lane.b32.xlu0 %v606, 16
        %v858 = vpop.permute.xlu0 %857
        %v860 = vmul.f32 %v519, %v858
        %861 = vrot.lane.b32.xlu0 %v607, 16
        %v862 = vpop.permute.xlu0 %861
        %v864 = vmul.f32 %v562, %v862
        %v865 = vadd.f32 %v860, %v864
        %v866 = vpack.c.bf16 %v865, %v865
        %868 = vrot.lane.b32.xlu0 %v866, 112
        %v869 = vpop.permute.xlu0 %868
        %871 = vrot.lane.b32.xlu0 %v624, 120
        %v872 = vpop.permute.xlu0 %871
        %v874 = vsel %vm629, %v869, 0
        %v877 = vsel %vm629, %v872, 0
        %879 = vmatprep.subr.bf16.mxu0 0
        %880 = vmatpush1.bf16.xpose.msra.mxu0 %v877
        %881 = vmatprep.subr.bf16.mxu0 0
        %882 = vmatpush1.bf16.xpose.msra.mxu0 0
        %883 = vmatprep.subr.bf16.mxu0 0
        %884 = vmatpush1.bf16.xpose.msra.mxu0 0
        %885 = vmatprep.subr.bf16.mxu0 0
        %886 = vmatpush1.bf16.xpose.msra.mxu0 0
        %887 = vmatprep.subr.bf16.mxu0 0
        %888 = vmatpush1.bf16.xpose.msra.mxu0 0
        %889 = vmatprep.subr.bf16.mxu0 0
        %890 = vmatpush1.bf16.xpose.msra.mxu0 0
        %891 = vmatprep.subr.bf16.mxu0 0
        %892 = vmatpush1.bf16.xpose.msra.mxu0 0
        %893 = vmatprep.subr.bf16.mxu0 0
        %894 = vmatpush1.bf16.xpose.msra.mxu0 0
        %895 = vmatprep.subr.bf16.mxu0 0
        %896 = vmatpush1.bf16.xpose.msra.mxu0 0
        %897 = vmatprep.subr.bf16.mxu0 0
        %898 = vmatpush1.bf16.xpose.msra.mxu0 0
        %899 = vmatprep.subr.bf16.mxu0 0
        %900 = vmatpush1.bf16.xpose.msra.mxu0 0
        %901 = vmatprep.subr.bf16.mxu0 0
        %902 = vmatpush1.bf16.xpose.msra.mxu0 0
        %903 = vmatprep.subr.bf16.mxu0 0
        %904 = vmatpush1.bf16.xpose.msra.mxu0 0
        %905 = vmatprep.subr.bf16.mxu0 0
        %906 = vmatpush1.bf16.xpose.msra.mxu0 0
        %907 = vmatprep.subr.bf16.mxu0 0
        %908 = vmatpush1.bf16.xpose.msra.mxu0 0
        %909 = vmatprep.subr.bf16.mxu0 0
        %910 = vmatpush1.bf16.xpose.msra.mxu0 0
        %911 = vmatprep.mubr.bf16.mxu0 0
        %912 = vmatmul.mubr.bf16.gmra.mrb[0].mxu0 %v874
        %v913 = vpop.f32.mrb[0].mxu0
        %v914 = vadd.f32 0.0, %v913
        %v915 = vpop.f32.mrb[0].mxu0
        %v916 = vpop.f32.mrb[0].mxu0
        %v917 = vpop.f32.mrb[0].mxu0
        %918 = vdwg.mxu0
        %v919 = vmul.f32 %v914, 0.35355338
        %v920 = vadd.f32 %v919, %v397
        %v921 = vsel %vm629, %v920, -inf
        %922 = vmax.xlane.f32.xlu0 %v921
        %v923 = vpop.xlane.xlu0 %922
        %v924 = vsub.f32 %v920, %v923
        %v925 = vmul.f32 %v924, 1.442695
        %v926 = vpow.pop %v925
        %v927 = vsel %vm629, %v926, 0.0
        %928 = vadd.xlane.f32.xlu0 %v927
        %v929 = vpop.xlane.xlu0 %928
        %v930 = vrcp.pop %v929
        %v931 = vmul.f32 %v929, %v930
        %v932 = vsub.f32 2.0, %v931
        %v933 = vmul.f32 %v930, %v932
        %v934 = vmul.f32 %v926, %v933
        %v935 = vpack.c.bf16 %v934, %v934
        %937 = vrot.lane.b32.xlu0 %v612, 120
        %v938 = vpop.permute.xlu0 %937
        %v940 = vsel %vm629, %v935, 0
        %v943 = vsel %vm696, %v938, 0
        %945 = vmatprep.subr.bf16.mxu0 0
        %946 = vmatpush1.bf16.msra.mxu0 %v943
        %947 = vmatprep.subr.bf16.mxu0 0
        %948 = vmatpush1.bf16.msra.mxu0 0
        %949 = vmatprep.subr.bf16.mxu0 0
        %950 = vmatpush1.bf16.msra.mxu0 0
        %951 = vmatprep.subr.bf16.mxu0 0
        %952 = vmatpush1.bf16.msra.mxu0 0
        %953 = vmatprep.subr.bf16.mxu0 0
        %954 = vmatpush1.bf16.msra.mxu0 0
        %955 = vmatprep.subr.bf16.mxu0 0
        %956 = vmatpush1.bf16.msra.mxu0 0
        %957 = vmatprep.subr.bf16.mxu0 0
        %958 = vmatpush1.bf16.msra.mxu0 0
        %959 = vmatprep.subr.bf16.mxu0 0
        %960 = vmatpush1.bf16.msra.mxu0 0
        %961 = vmatprep.subr.bf16.mxu0 0
        %962 = vmatpush1.bf16.msra.mxu0 0
        %963 = vmatprep.subr.bf16.mxu0 0
        %964 = vmatpush1.bf16.msra.mxu0 0
        %965 = vmatprep.subr.bf16.mxu0 0
        %966 = vmatpush1.bf16.msra.mxu0 0
        %967 = vmatprep.subr.bf16.mxu0 0
        %968 = vmatpush1.bf16.msra.mxu0 0
        %969 = vmatprep.subr.bf16.mxu0 0
        %970 = vmatpush1.bf16.msra.mxu0 0
        %971 = vmatprep.subr.bf16.mxu0 0
        %972 = vmatpush1.bf16.msra.mxu0 0
        %973 = vmatprep.subr.bf16.mxu0 0
        %974 = vmatpush1.bf16.msra.mxu0 0
        %975 = vmatprep.subr.bf16.mxu0 0
        %976 = vmatpush1.bf16.msra.mxu0 0
        %977 = vmatprep.mubr.bf16.mxu0 0
        %978 = vmatmul.mubr.bf16.gmra.mrb[0].mxu0 %v940
        %v979 = vpop.f32.mrb[0].mxu0
        %v980 = vadd.f32 0.0, %v979
        %v981 = vpop.f32.mrb[0].mxu0
        %v982 = vpop.f32.mrb[0].mxu0
        %v983 = vpop.f32.mrb[0].mxu0
        %984 = vdwg.mxu0
        %986 = vrot.lane.b32.xlu0 %v980, 16
        %v987 = vpop.permute.xlu0 %986
        %vm989 = vcmask 195712
        %990 = vst.msk [vmem:[#allocation2] sm:$0xff] %vm989, %v987
        %991 = vrot.lane.b32.xlu0 %v606, 24
        %v992 = vpop.permute.xlu0 %991
        %v994 = vmul.f32 %v519, %v992
        %995 = vrot.lane.b32.xlu0 %v607, 24
        %v996 = vpop.permute.xlu0 %995
        %v998 = vmul.f32 %v562, %v996
        %v999 = vadd.f32 %v994, %v998
        %v1000 = vpack.c.bf16 %v999, %v999
        %1002 = vrot.lane.b32.xlu0 %v1000, 104
        %v1003 = vpop.permute.xlu0 %1002
        %v1005 = vsel %vm629, %v1003, 0
        %1007 = vmatprep.subr.bf16.mxu0 0
        %1008 = vmatpush1.bf16.xpose.msra.mxu0 %v877
        %1009 = vmatprep.subr.bf16.mxu0 0
        %1010 = vmatpush1.bf16.xpose.msra.mxu0 0
        %1011 = vmatprep.subr.bf16.mxu0 0
        %1012 = vmatpush1.bf16.xpose.msra.mxu0 0
        %1013 = vmatprep.subr.bf16.mxu0 0
        %1014 = vmatpush1.bf16.xpose.msra.mxu0 0
        %1015 = vmatprep.subr.bf16.mxu0 0
        %1016 = vmatpush1.bf16.xpose.msra.mxu0 0
        %1017 = vmatprep.subr.bf16.mxu0 0
        %1018 = vmatpush1.bf16.xpose.msra.mxu0 0
        %1019 = vmatprep.subr.bf16.mxu0 0
        %1020 = vmatpush1.bf16.xpose.msra.mxu0 0
        %1021 = vmatprep.subr.bf16.mxu0 0
        %1022 = vmatpush1.bf16.xpose.msra.mxu0 0
        %1023 = vmatprep.subr.bf16.mxu0 0
        %1024 = vmatpush1.bf16.xpose.msra.mxu0 0
        %1025 = vmatprep.subr.bf16.mxu0 0
        %1026 = vmatpush1.bf16.xpose.msra.mxu0 0
        %1027 = vmatprep.subr.bf16.mxu0 0
        %1028 = vmatpush1.bf16.xpose.msra.mxu0 0
        %1029 = vmatprep.subr.bf16.mxu0 0
        %1030 = vmatpush1.bf16.xpose.msra.mxu0 0
        %1031 = vmatprep.subr.bf16.mxu0 0
        %1032 = vmatpush1.bf16.xpose.msra.mxu0 0
        %1033 = vmatprep.subr.bf16.mxu0 0
        %1034 = vmatpush1.bf16.xpose.msra.mxu0 0
        %1035 = vmatprep.subr.bf16.mxu0 0
        %1036 = vmatpush1.bf16.xpose.msra.mxu0 0
        %1037 = vmatprep.subr.bf16.mxu0 0
        %1038 = vmatpush1.bf16.xpose.msra.mxu0 0
        %1039 = vmatprep.mubr.bf16.mxu0 0
        %1040 = vmatmul.mubr.bf16.gmra.mrb[0].mxu0 %v1005
        %v1041 = vpop.f32.mrb[0].mxu0
        %v1042 = vadd.f32 0.0, %v1041
        %v1043 = vpop.f32.mrb[0].mxu0
        %v1044 = vpop.f32.mrb[0].mxu0
        %v1045 = vpop.f32.mrb[0].mxu0
        %1046 = vdwg.mxu0
        %v1047 = vmul.f32 %v1042, 0.35355338
        %v1048 = vadd.f32 %v1047, %v397
        %v1049 = vsel %vm629, %v1048, -inf
        %1050 = vmax.xlane.f32.xlu0 %v1049
        %v1051 = vpop.xlane.xlu0 %1050
        %v1052 = vsub.f32 %v1048, %v1051
        %v1053 = vmul.f32 %v1052, 1.442695
        %v1054 = vpow.pop %v1053
        %v1055 = vsel %vm629, %v1054, 0.0
        %1056 = vadd.xlane.f32.xlu0 %v1055
        %v1057 = vpop.xlane.xlu0 %1056
        %v1058 = vrcp.pop %v1057
        %v1059 = vmul.f32 %v1057, %v1058
        %v1060 = vsub.f32 2.0, %v1059
        %v1061 = vmul.f32 %v1058, %v1060
        %v1062 = vmul.f32 %v1054, %v1061
        %v1063 = vpack.c.bf16 %v1062, %v1062
        %v1065 = vsel %vm629, %v1063, 0
        %1067 = vmatprep.subr.bf16.mxu0 0
        %1068 = vmatpush1.bf16.msra.mxu0 %v943
        %1069 = vmatprep.subr.bf16.mxu0 0
        %1070 = vmatpush1.bf16.msra.mxu0 0
        %1071 = vmatprep.subr.bf16.mxu0 0
        %1072 = vmatpush1.bf16.msra.mxu0 0
        %1073 = vmatprep.subr.bf16.mxu0 0
        %1074 = vmatpush1.bf16.msra.mxu0 0
        %1075 = vmatprep.subr.bf16.mxu0 0
        %1076 = vmatpush1.bf16.msra.mxu0 0
        %1077 = vmatprep.subr.bf16.mxu0 0
        %1078 = vmatpush1.bf16.msra.mxu0 0
        %1079 = vmatprep.subr.bf16.mxu0 0
        %1080 = vmatpush1.bf16.msra.mxu0 0
        %1081 = vmatprep.subr.bf16.mxu0 0
        %1082 = vmatpush1.bf16.msra.mxu0 0
        %1083 = vmatprep.subr.bf16.mxu0 0
        %1084 = vmatpush1.bf16.msra.mxu0 0
        %1085 = vmatprep.subr.bf16.mxu0 0
        %1086 = vmatpush1.bf16.msra.mxu0 0
        %1087 = vmatprep.subr.bf16.mxu0 0
        %1088 = vmatpush1.bf16.msra.mxu0 0
        %1089 = vmatprep.subr.bf16.mxu0 0
        %1090 = vmatpush1.bf16.msra.mxu0 0
        %1091 = vmatprep.subr.bf16.mxu0 0
        %1092 = vmatpush1.bf16.msra.mxu0 0
        %1093 = vmatprep.subr.bf16.mxu0 0
        %1094 = vmatpush1.bf16.msra.mxu0 0
        %1095 = vmatprep.subr.bf16.mxu0 0
        %1096 = vmatpush1.bf16.msra.mxu0 0
        %1097 = vmatprep.subr.bf16.mxu0 0
        %1098 = vmatpush1.bf16.msra.mxu0 0
        %1099 = vmatprep.mubr.bf16.mxu0 0
        %1100 = vmatmul.mubr.bf16.gmra.mrb[0].mxu0 %v1065
        %v1101 = vpop.f32.mrb[0].mxu0
        %v1102 = vadd.f32 0.0, %v1101
        %v1103 = vpop.f32.mrb[0].mxu0
        %v1104 = vpop.f32.mrb[0].mxu0
        %v1105 = vpop.f32.mrb[0].mxu0
        %1106 = vdwg.mxu0
        %1108 = vrot.lane.b32.xlu0 %v1102, 24
        %v1109 = vpop.permute.xlu0 %1108
        %vm1111 = vcmask 261312
        %1112 = vst.msk [vmem:[#allocation2] sm:$0xff] %vm1111, %v1109
        %v1113 = vld [vmem:[#allocation2] sm:$0xff]
        %v1114 = vpack.c.bf16 %v1113, %v1113
        %v1115 = vld [vmem:[#allocation8] sm:$0xf]
        %v1116 = vld [vmem:[#allocation8 + $0x4] sm:$0xf]
        %v1117 = vld [vmem:[#allocation8 + $0x8] sm:$0xf]
        %v1118 = vld [vmem:[#allocation8 + $0xc] sm:$0xf]
        %v1123 = vunpack.c.l.b16 %v1115
        %v1124 = vunpack.c.l.b16 %v1116
        %v1125 = vunpack.c.l.b16 %v1117
        %v1126 = vunpack.c.l.b16 %v1118
        %v1127 = vpack.c.b16 %v1124, %v1123
        %v1128 = vpack.c.b16 %v1126, %v1125
        %v1132 = vsel %vm400, %v1114, 0
        %1134 = vmatprep.subr.bf16.mxu0 0
        %1135 = vmatpush1.bf16.msra.mxu0 %v1127
        %1136 = vmatprep.subr.bf16.mxu0 0
        %1137 = vmatpush1.bf16.msra.mxu0 %v1128
        %1138 = vmatprep.subr.bf16.mxu0 0
        %1139 = vmatpush1.bf16.msra.mxu0 0
        %1140 = vmatprep.subr.bf16.mxu0 0
        %1141 = vmatpush1.bf16.msra.mxu0 0
        %1142 = vmatprep.subr.bf16.mxu0 0
        %1143 = vmatpush1.bf16.msra.mxu0 0
        %1144 = vmatprep.subr.bf16.mxu0 0
        %1145 = vmatpush1.bf16.msra.mxu0 0
        %1146 = vmatprep.subr.bf16.mxu0 0
        %1147 = vmatpush1.bf16.msra.mxu0 0
        %1148 = vmatprep.subr.bf16.mxu0 0
        %1149 = vmatpush1.bf16.msra.mxu0 0
        %1150 = vmatprep.subr.bf16.mxu0 0
        %1151 = vmatpush1.bf16.msra.mxu0 0
        %1152 = vmatprep.subr.bf16.mxu0 0
        %1153 = vmatpush1.bf16.msra.mxu0 0
        %1154 = vmatprep.subr.bf16.mxu0 0
        %1155 = vmatpush1.bf16.msra.mxu0 0
        %1156 = vmatprep.subr.bf16.mxu0 0
        %1157 = vmatpush1.bf16.msra.mxu0 0
        %1158 = vmatprep.subr.bf16.mxu0 0
        %1159 = vmatpush1.bf16.msra.mxu0 0
        %1160 = vmatprep.subr.bf16.mxu0 0
        %1161 = vmatpush1.bf16.msra.mxu0 0
        %1162 = vmatprep.subr.bf16.mxu0 0
        %1163 = vmatpush1.bf16.msra.mxu0 0
        %1164 = vmatprep.subr.bf16.mxu0 0
        %1165 = vmatpush1.bf16.msra.mxu0 0
        %1166 = vmatprep.mubr.bf16.mxu0 0
        %1167 = vmatmul.mubr.bf16.gmra.mrb[0].mxu0 %v1132
        %v1168 = vpop.f32.mrb[0].mxu0
        %v1169 = vadd.f32 0.0, %v1168
        %v1170 = vpop.f32.mrb[0].mxu0
        %v1171 = vpop.f32.mrb[0].mxu0
        %v1172 = vpop.f32.mrb[0].mxu0
        %1173 = vdwg.mxu0
        %v1174 = vadd.f32 %v391, %v1169
        %v1175 = vld [vmem:[%s6] sm:$0x1]
        %v1176 = vmul.f32 %v1174, %v1174
        %v1177 = vsel %vm400, %v1176, 0.0
        %1178 = vadd.xlane.f32.xlu0 %v1177
        %v1179 = vpop.xlane.xlu0 %1178
        %v1180 = vmul.f32 %v1179, %v404
        %v1181 = vadd.f32 %v1180, 1e-06
        %v1182 = vrsqrt.pop %v1181
        %v1183 = vmul.f32 %v1174, %v1182
        %v1185 = vlaneseq
        %v1186 = vshrl.u32 %v1185, 7
        %v1187 = vsub.s32 0, %v1186
        %v1188 = vrot.slane %v1175, %v1187
        %v1190 = vmul.f32 %v1183, %v1188
        %v1191 = vpack.c.bf16 %v1190, %v1190
        %v1192 = vld [vmem:[#allocation9] sm:$0xff]
        %v1193 = vld [vmem:[#allocation9 + $0x8] sm:$0xff]
        %v1194 = vld [vmem:[#allocation9 + $0x10] sm:$0xff]
        %v1195 = vld [vmem:[#allocation9 + $0x18] sm:$0xff]
        %v1200 = vunpack.c.l.b16 %v1192
        %v1201 = vunpack.c.h.b16 %v1192
        %v1202 = vunpack.c.l.b16 %v1193
        %v1203 = vunpack.c.h.b16 %v1193
        %v1204 = vunpack.c.l.b16 %v1194
        %v1205 = vunpack.c.h.b16 %v1194
        %v1206 = vunpack.c.l.b16 %v1195
        %v1207 = vunpack.c.h.b16 %v1195
        %v1208 = vpack.c.b16 %v1202, %v1200
        %v1209 = vpack.c.b16 %v1203, %v1201
        %v1210 = vpack.c.b16 %v1206, %v1204
        %v1211 = vpack.c.b16 %v1207, %v1205
        %v1217 = vsel %vm400, %v1191, 0
        %1219 = vmatprep.subr.bf16.mxu0 %v1209
        %1220 = vmatpush1.bf16.msra.mxu0 %v1208
        %1221 = vmatprep.subr.bf16.mxu0 %v1211
        %1222 = vmatpush1.bf16.msra.mxu0 %v1210
        %1223 = vmatprep.subr.bf16.mxu0 0
        %1224 = vmatpush1.bf16.msra.mxu0 0
        %1225 = vmatprep.subr.bf16.mxu0 0
        %1226 = vmatpush1.bf16.msra.mxu0 0
        %1227 = vmatprep.subr.bf16.mxu0 0
        %1228 = vmatpush1.bf16.msra.mxu0 0
        %1229 = vmatprep.subr.bf16.mxu0 0
        %1230 = vmatpush1.bf16.msra.mxu0 0
        %1231 = vmatprep.subr.bf16.mxu0 0
        %1232 = vmatpush1.bf16.msra.mxu0 0
        %1233 = vmatprep.subr.bf16.mxu0 0
        %1234 = vmatpush1.bf16.msra.mxu0 0
        %1235 = vmatprep.subr.bf16.mxu0 0
        %1236 = vmatpush1.bf16.msra.mxu0 0
        %1237 = vmatprep.subr.bf16.mxu0 0
        %1238 = vmatpush1.bf16.msra.mxu0 0
        %1239 = vmatprep.subr.bf16.mxu0 0
        %1240 = vmatpush1.bf16.msra.mxu0 0
        %1241 = vmatprep.subr.bf16.mxu0 0
        %1242 = vmatpush1.bf16.msra.mxu0 0
        %1243 = vmatprep.subr.bf16.mxu0 0
        %1244 = vmatpush1.bf16.msra.mxu0 0
        %1245 = vmatprep.subr.bf16.mxu0 0
        %1246 = vmatpush1.bf16.msra.mxu0 0
        %1247 = vmatprep.subr.bf16.mxu0 0
        %1248 = vmatpush1.bf16.msra.mxu0 0
        %1249 = vmatprep.subr.bf16.mxu0 0
        %1250 = vmatpush1.bf16.msra.mxu0 0
        %1251 = vmatprep.mubr.bf16.mxu0 0
        %1252 = vmatmul.mubr.bf16.gmra.mrb[0].mxu0 %v1217
        %v1253 = vpop.f32.mrb[0].mxu0
        %v1254 = vadd.f32 0.0, %v1253
        %v1255 = vpop.f32.mrb[0].mxu0
        %v1256 = vadd.f32 0.0, %v1255
        %v1257 = vpop.f32.mrb[0].mxu0
        %v1258 = vpop.f32.mrb[0].mxu0
        %1259 = vdwg.mxu0
        %v1260 = vxor.u32 %v1254, 2147483648
        %v1261 = vmul.f32 %v1260, 1.442695
        %v1262 = vpow.pop %v1261
        %v1263 = vadd.f32 %v1262, 1.0
        %v1264 = vrcp.pop %v1263
        %v1265 = vmul.f32 1.0, %v1264
        %v1266 = vmul.f32 %v1254, %v1265
        %v1267 = vmul.f32 %v1266, %v1256
        %v1268 = vpack.c.bf16 %v1267, %v1267
        %v1269 = vld [vmem:[%s8] sm:$0xf]
        %v1270 = vld [vmem:[%s8 + $0x4] sm:$0xf]
        %v1271 = vld [vmem:[%s8 + $0x8] sm:$0xf]
        %v1272 = vld [vmem:[%s8 + $0xc] sm:$0xf]
        %v1273 = vld [vmem:[%s8 + $0x10] sm:$0xf]
        %v1274 = vld [vmem:[%s8 + $0x14] sm:$0xf]
        %v1275 = vld [vmem:[%s8 + $0x18] sm:$0xf]
        %v1276 = vld [vmem:[%s8 + $0x1c] sm:$0xf]
        %v1277 = vld [vmem:[%s8 + $0x20] sm:$0xf]
        %v1278 = vld [vmem:[%s8 + $0x24] sm:$0xf]
        %v1279 = vld [vmem:[%s8 + $0x28] sm:$0xf]
        %v1280 = vld [vmem:[%s8 + $0x2c] sm:$0xf]
        %v1281 = vld [vmem:[%s8 + $0x30] sm:$0xf]
        %v1282 = vld [vmem:[%s8 + $0x34] sm:$0xf]
        %v1283 = vld [vmem:[%s8 + $0x38] sm:$0xf]
        %v1284 = vld [vmem:[%s8 + $0x3c] sm:$0xf]
        %v1301 = vunpack.c.l.b16 %v1269
        %v1302 = vunpack.c.l.b16 %v1270
        %v1303 = vunpack.c.l.b16 %v1271
        %v1304 = vunpack.c.l.b16 %v1272
        %v1305 = vunpack.c.l.b16 %v1273
        %v1306 = vunpack.c.l.b16 %v1274
        %v1307 = vunpack.c.l.b16 %v1275
        %v1308 = vunpack.c.l.b16 %v1276
        %v1309 = vunpack.c.l.b16 %v1277
        %v1310 = vunpack.c.l.b16 %v1278
        %v1311 = vunpack.c.l.b16 %v1279
        %v1312 = vunpack.c.l.b16 %v1280
        %v1313 = vunpack.c.l.b16 %v1281
        %v1314 = vunpack.c.l.b16 %v1282
        %v1315 = vunpack.c.l.b16 %v1283
        %v1316 = vunpack.c.l.b16 %v1284
        %v1317 = vpack.c.b16 %v1302, %v1301
        %v1318 = vpack.c.b16 %v1304, %v1303
        %v1319 = vpack.c.b16 %v1306, %v1305
        %v1320 = vpack.c.b16 %v1308, %v1307
        %v1321 = vpack.c.b16 %v1310, %v1309
        %v1322 = vpack.c.b16 %v1312, %v1311
        %v1323 = vpack.c.b16 %v1314, %v1313
        %v1324 = vpack.c.b16 %v1316, %v1315
        %1333 = vmatprep.subr.bf16.mxu0 0
        %1334 = vmatpush1.bf16.msra.mxu0 %v1317
        %1335 = vmatprep.subr.bf16.mxu0 0
        %1336 = vmatpush1.bf16.msra.mxu0 %v1318
        %1337 = vmatprep.subr.bf16.mxu0 0
        %1338 = vmatpush1.bf16.msra.mxu0 %v1319
        %1339 = vmatprep.subr.bf16.mxu0 0
        %1340 = vmatpush1.bf16.msra.mxu0 %v1320
        %1341 = vmatprep.subr.bf16.mxu0 0
        %1342 = vmatpush1.bf16.msra.mxu0 %v1321
        %1343 = vmatprep.subr.bf16.mxu0 0
        %1344 = vmatpush1.bf16.msra.mxu0 %v1322
        %1345 = vmatprep.subr.bf16.mxu0 0
        %1346 = vmatpush1.bf16.msra.mxu0 %v1323
        %1347 = vmatprep.subr.bf16.mxu0 0
        %1348 = vmatpush1.bf16.msra.mxu0 %v1324
        %1349 = vmatprep.subr.bf16.mxu0 0
        %1350 = vmatpush1.bf16.msra.mxu0 0
        %1351 = vmatprep.subr.bf16.mxu0 0
        %1352 = vmatpush1.bf16.msra.mxu0 0
        %1353 = vmatprep.subr.bf16.mxu0 0
        %1354 = vmatpush1.bf16.msra.mxu0 0
        %1355 = vmatprep.subr.bf16.mxu0 0
        %1356 = vmatpush1.bf16.msra.mxu0 0
        %1357 = vmatprep.subr.bf16.mxu0 0
        %1358 = vmatpush1.bf16.msra.mxu0 0
        %1359 = vmatprep.subr.bf16.mxu0 0
        %1360 = vmatpush1.bf16.msra.mxu0 0
        %1361 = vmatprep.subr.bf16.mxu0 0
        %1362 = vmatpush1.bf16.msra.mxu0 0
        %1363 = vmatprep.subr.bf16.mxu0 0
        %1364 = vmatpush1.bf16.msra.mxu0 0
        %1365 = vmatprep.mubr.bf16.mxu0 0
        %1366 = vmatmul.mubr.bf16.gmra.mrb[0].mxu0 %v1268
        %v1367 = vpop.f32.mrb[0].mxu0
        %v1368 = vadd.f32 0.0, %v1367
        %v1369 = vpop.f32.mrb[0].mxu0
        %v1370 = vpop.f32.mrb[0].mxu0
        %v1371 = vpop.f32.mrb[0].mxu0
        %1372 = vdwg.mxu0
        %v1373 = vadd.f32 %v1174, %v1368
        %1374 = vst.msk [vmem:[%s389] sm:$0xff] %vm400, %v1373
        %s1375 = sand.u32 %s230, 1
        %s1376 = scalar_lea.sflag [#allocation5], %s1375
        %s1377 = sand.u32 %s230, 1
        %s1378 = smul.addr %s1377, 8
        %s1379 = scalar_lea.vmem [#allocation11], %s1378
        // Predicated region
        $region73: #{tpu_custom_call.1} parent=55 // pred_check
          %p1380 = pneg %p240
        $region74: #{tpu_custom_call.1} parent=55 // pred_check_branch
          %1382 = sbr.rel (%p1380) target = $region76
        $region75: #{tpu_custom_call.1} parent=55 // pred_region
          %s1384 = ssub.s32 128, 128
          %1385 = vsyncadd %s1376, %s1384
          %s1386 = smul.addr %s28, 128
          %s1387 = scalar_lea.hbm %s9, %s1386
          %s1389 = sshll.u32 %s1379, 4
          %s1390 = int_to_ptr.vmem [resolvable:$true] %s1389
          %1392 = dma.vmem_to_hbm [thread:$0]  %s1390, 128, %s1387, %s1376
        $region76: #{tpu_custom_call.1} parent=55 // pred_fallthru
          _
      $region56: #{tpu_custom_call.1} parent=5 // pred_fallthru
        _
      %p1393 = scmp.le.s32.totalorder 2, %s23
      // Predicated region
      $region77: #{tpu_custom_call.1} parent=5 // pred_check
        %p1394 = pneg %p1393
      $region78: #{tpu_custom_call.1} parent=5 // pred_check_branch
        %1396 = sbr.rel (%p1394) target = $region80
      $region79: #{tpu_custom_call.1} parent=5 // pred_region
        %s1397 = ssub.s32 %s23, 2
        // Predicated region
        $region81: #{tpu_custom_call.1} parent=79 // pred_check
          %p1398 = pneg %p246
        $region82: #{tpu_custom_call.1} parent=79 // pred_check_branch
          %1400 = sbr.rel (%p1398) target = $region84
        $region83: #{tpu_custom_call.1} parent=79 // pred_region
          %s1401 = sand.u32 %s231, 1
          %s1402 = scalar_lea.sflag [#allocation5], %s1401
          %s1403 = sand.u32 %s231, 1
          %s1404 = smul.addr %s1403, 8
          %s1405 = scalar_lea.vmem [#allocation11], %s1404
          %1406 = dma.done %s1402, 128
        $region84: #{tpu_custom_call.1} parent=79 // pred_fallthru
          _
      $region80: #{tpu_custom_call.1} parent=5 // pred_fallthru
        _
    $region6: #{tpu_custom_call.1} parent=1 // loop_footer
      %s27 = sadd.s32 1, %s23
    $region7: #{tpu_custom_call.1} parent=1 // loop_footer_branch
      %22 = sbr.rel target = $region3
    $region8: #{tpu_custom_call.1} parent=1 // loop_exit
      _
    %1407 = vsyncpa [#allocation4], 1
    %s1408 = scalar_lea.sflag [#allocation4], 1
    %1409 = vsyncpa %s1408, 1
    %1410 = vsyncpa [#allocation7], 1
    %1411 = vsyncpa [#allocation10], 1
    %1412 = vsyncpa [#allocation5], 1
    %s1413 = scalar_lea.sflag [#allocation5], 1
    %1414 = vsyncpa %s1413, 1

</llo_original>
